<compile_context>
chip_gen: v5e
topology: v5e:2x2
jax: 0.10.0
libtpu: 0.0.40
codegen_flags: <defaults>
</compile_context>

<pallas_src>
import functools

import jax
import jax.numpy as jnp
from jax import lax
from jax.experimental import pallas as pl
from jax.experimental.pallas import tpu as pltpu


def _mlp_dropout_kernel(seed_ref,                      # scalar-prefetch (SMEM)
                        x_ref,
                        w0_ref, b0_ref,
                        w1_ref, b1_ref,
                        w2_ref, b2_ref,
                        w3_ref, b3_ref,
                        o_ref,
                        *, p, apply_dropout, tile_b):
    # Matmul helper: cast the activation to the weight dtype (bf16 on the MXU
    # fast path), accumulate in f32.
    def mm(a, w_ref):
        return jnp.dot(a.astype(w_ref.dtype), w_ref[...],
                       preferred_element_type=jnp.float32)

    x = x_ref[...].astype(jnp.float32)

    # hidden: Linear(n_feature -> H0) + ReLU
    h = jnp.maximum(mm(x, w0_ref) + b0_ref[...], 0.0)

    # dropout1: inverted dropout with an in-kernel counter-based hash PRNG.
    # Mask depends on the *global* element index + seed, so different batch
    # tiles get independent masks and the result is tiling-invariant.
    if apply_dropout and p > 0.0:
        h0 = h.shape[-1]
        rows = lax.broadcasted_iota(jnp.int32, h.shape, 0)
        cols = lax.broadcasted_iota(jnp.int32, h.shape, 1)
        gid = (pl.program_id(0) * tile_b + rows) * h0 + cols
        u = gid.astype(jnp.uint32)
        u = u + seed_ref[0].astype(jnp.uint32) * jnp.uint32(0x9E3779B9)
        # splitmix32-style finalizer (uniform-ish uint32 bits)
        u = u ^ (u >> 16)
        u = u * jnp.uint32(0x7FEB352D)
        u = u ^ (u >> 15)
        u = u * jnp.uint32(0x846CA68B)
        u = u ^ (u >> 16)
        thr = jnp.uint32(int(round(p * (2.0 ** 32))))   # P(u < thr) = p
        h = jnp.where(u >= thr, h * (1.0 / (1.0 - p)), 0.0)

    # hidden1: Linear(H0 -> H1) + ReLU
    h = jnp.maximum(mm(h, w1_ref) + b1_ref[...], 0.0)
    # hidden2: Linear(H1 -> H2) + ReLU
    h = jnp.maximum(mm(h, w2_ref) + b2_ref[...], 0.0)
    # predict: Linear(H2 -> n_output_padded) + sigmoid
    o_ref[...] = jax.nn.sigmoid(mm(h, w3_ref) + b3_ref[...])


def _round_up(x, m):
    return ((x + m - 1) // m) * m


def mlp_dropout_reg_forward(x, params, seed, *, p=0.2, training=True,
                            tile_b=256, compute_dtype=jnp.bfloat16):
    """params = (w0, b0, w1, b1, w2, b2, w3, b3); weights (in, out), biases (1, out)."""
    w0, b0, w1, b1, w2, b2, w3, b3 = params
    B, n_feature = x.shape
    n_output = w3.shape[1]

    # Pad the batch to a multiple of the MXU-sized tile, and pad the output
    # lane dim to a multiple of 128 so the final store is lane-dense.
    b_pad = _round_up(B, tile_b)
    out_pad = _round_up(n_output, 128)

    x_p = jnp.zeros((b_pad, n_feature), jnp.float32).at[:B].set(
        x.astype(jnp.float32))
    w3_p = jnp.zeros((w3.shape[0], out_pad), w3.dtype).at[:, :n_output].set(w3)
    b3_p = jnp.zeros((1, out_pad), jnp.float32).at[:, :n_output].set(
        b3.astype(jnp.float32))

    # bf16 matmul operands (MXU fast path on v6e/v7x), f32 biases/epilogue.
    w0c, w1c, w2c, w3c = (w.astype(compute_dtype) for w in (w0, w1, w2, w3_p))
    b0c, b1c, b2c = (b.astype(jnp.float32) for b in (b0, b1, b2))

    kernel = functools.partial(_mlp_dropout_kernel, p=float(p),
                               apply_dropout=bool(training), tile_b=tile_b)

    # Weights/biases: constant block index -> VMEM-resident, DMA'd once.
    def wspec(shape):
        return pl.BlockSpec(shape, lambda i, s: (0, 0))

    grid = (b_pad // tile_b,)

    h0, h1, h2 = w0.shape[1], w1.shape[1], w2.shape[1]
    flops = 2 * b_pad * (n_feature * h0 + h0 * h1 + h1 * h2 + h2 * out_pad)
    weight_bytes = sum(int(a.size) * a.dtype.itemsize
                       for a in (w0c, b0c, w1c, b1c, w2c, b2c, w3c, b3_p))
    bytes_accessed = int(x_p.size) * 4 + weight_bytes + b_pad * out_pad * 4

    out = pl.pallas_call(
        kernel,
        out_shape=jax.ShapeDtypeStruct((b_pad, out_pad), jnp.float32),
        grid_spec=pltpu.PrefetchScalarGridSpec(
            num_scalar_prefetch=1,
            grid=grid,
            in_specs=[
                pl.BlockSpec((tile_b, n_feature), lambda i, s: (i, 0)),
                wspec(w0c.shape), wspec(b0c.shape),
                wspec(w1c.shape), wspec(b1c.shape),
                wspec(w2c.shape), wspec(b2c.shape),
                wspec(w3c.shape), wspec(b3_p.shape),
            ],
            out_specs=pl.BlockSpec((tile_b, out_pad), lambda i, s: (i, 0)),
        ),
        compiler_params=pltpu.CompilerParams(
            dimension_semantics=("parallel",)),
        cost_estimate=pl.CostEstimate(flops=flops,
                                      transcendentals=b_pad * out_pad,
                                      bytes_accessed=bytes_accessed),
    )(seed, x_p, w0c, b0c, w1c, b1c, w2c, b2c, w3c, b3_p)

    return out[:B, :n_output]


def init_params(key, n_feature, n_output, reg_sizes):
    dims = [n_feature] + list(reg_sizes) + [n_output]
    params = []
    for i in range(len(dims) - 1):
        key, kw, kb = jax.random.split(key, 3)
        bound = 1.0 / jnp.sqrt(dims[i])
        w = jax.random.uniform(kw, (dims[i], dims[i + 1]), jnp.float32,
                               minval=-bound, maxval=bound)
        b = jax.random.uniform(kb, (1, dims[i + 1]), jnp.float32,
                               minval=-bound, maxval=bound)
        params += [w, b]
    return tuple(params)


def reference_forward_eval(x, params, compute_dtype=jnp.bfloat16):
    """Pure-JAX reference (dropout = identity) with the same bf16-operand /
    f32-accumulate numerics as the kernel."""
    w0, b0, w1, b1, w2, b2, w3, b3 = params

    def lin(a, w, b):
        return jnp.dot(a.astype(compute_dtype), w.astype(compute_dtype),
                       preferred_element_type=jnp.float32) + b

    h = jnp.maximum(lin(x, w0, b0), 0.0)
    h = jnp.maximum(lin(h, w1, b1), 0.0)
    h = jnp.maximum(lin(h, w2, b2), 0.0)
    return jax.nn.sigmoid(lin(h, w3, b3))


if __name__ == "__main__":
    # getDefaultModel: hiddenLayers = [32, 256, 32], p = 0.2
    n_feature, n_output = 16, 4
    reg_sizes = (32, 256, 32)
    p = 0.2
    B = 8

    key = jax.random.PRNGKey(0)
    key, kx = jax.random.split(key)
    x = jax.random.normal(kx, (B, n_feature), jnp.float32)
    params = init_params(key, n_feature, n_output, reg_sizes)
    seed = jnp.array([1234], dtype=jnp.int32)

    # eval mode (dropout = identity): check against pure-JAX reference
    y_eval = jax.block_until_ready(
        mlp_dropout_reg_forward(x, params, seed, p=p, training=False))
    y_ref = reference_forward_eval(x, params)
    assert y_eval.shape == (B, n_output)
    assert jnp.allclose(y_eval, y_ref, atol=2e-3, rtol=2e-3), "eval-mode mismatch"

    # training mode (in-kernel hash-PRNG inverted dropout)
    y_train = jax.block_until_ready(
        mlp_dropout_reg_forward(x, params, seed, p=p, training=True))
    assert y_train.shape == (B, n_output)
    assert bool(jnp.all(jnp.isfinite(y_train)))
    assert bool(jnp.all((y_train > 0.0) & (y_train < 1.0)))

    print("KERNEL_OK")
</pallas_src>

<mosaic_0001>
module attributes {stable_mosaic.version = 11 : i64} {
  func.func @_mlp_dropout_kernel(%arg0: i32, %arg1: memref<1xi32, #tpu.memory_space<smem>>, %arg2: memref<256x16xf32, #tpu.memory_space<vmem>>, %arg3: memref<16x32xbf16, #tpu.memory_space<vmem>>, %arg4: memref<1x32xf32, #tpu.memory_space<vmem>>, %arg5: memref<32x256xbf16, #tpu.memory_space<vmem>>, %arg6: memref<1x256xf32, #tpu.memory_space<vmem>>, %arg7: memref<256x32xbf16, #tpu.memory_space<vmem>>, %arg8: memref<1x32xf32, #tpu.memory_space<vmem>>, %arg9: memref<32x128xbf16, #tpu.memory_space<vmem>>, %arg10: memref<1x128xf32, #tpu.memory_space<vmem>>, %arg11: memref<256x128xf32, #tpu.memory_space<vmem>>) attributes {dimension_semantics = [#tpu.dimension_semantics<parallel>], iteration_bounds = array<i64: 1>, scalar_prefetch = 1 : i64, scratch_operands = 0 : i64, tpu.core_type = #tpu.core_type<tc>, window_params = [{transform_indices = @transform_0, window_bounds = array<i64: 256, 16>}, {pipeline_mode = #tpu.pipeline_mode<synchronous>, transform_indices = @transform_1, window_bounds = array<i64: 16, 32>}, {pipeline_mode = #tpu.pipeline_mode<synchronous>, transform_indices = @transform_2, window_bounds = array<i64: 1, 32>}, {pipeline_mode = #tpu.pipeline_mode<synchronous>, transform_indices = @transform_3, window_bounds = array<i64: 32, 256>}, {pipeline_mode = #tpu.pipeline_mode<synchronous>, transform_indices = @transform_4, window_bounds = array<i64: 1, 256>}, {pipeline_mode = #tpu.pipeline_mode<synchronous>, transform_indices = @transform_5, window_bounds = array<i64: 256, 32>}, {pipeline_mode = #tpu.pipeline_mode<synchronous>, transform_indices = @transform_6, window_bounds = array<i64: 1, 32>}, {pipeline_mode = #tpu.pipeline_mode<synchronous>, transform_indices = @transform_7, window_bounds = array<i64: 32, 128>}, {pipeline_mode = #tpu.pipeline_mode<synchronous>, transform_indices = @transform_8, window_bounds = array<i64: 1, 128>}, {transform_indices = @transform_9, window_bounds = array<i64: 256, 128>}]} {
    %c0 = arith.constant 0 : index
    %c0_0 = arith.constant 0 : index
    %0 = vector.load %arg2[%c0, %c0_0] : memref<256x16xf32, #tpu.memory_space<vmem>>, vector<256x16xf32>
    %1 = arith.truncf %0 : vector<256x16xf32> to vector<256x16xbf16>
    %c0_1 = arith.constant 0 : index
    %c0_2 = arith.constant 0 : index
    %2 = vector.load %arg3[%c0_1, %c0_2] : memref<16x32xbf16, #tpu.memory_space<vmem>>, vector<16x32xbf16>
    %cst = arith.constant dense<0.000000e+00> : vector<256x32xf32>
    %3 = tpu.matmul %1, %2, %cst {dimension_numbers = #tpu.dot_dimension_numbers<[1], [0], [0], [1], [0, 0, 1, 1], [], []>} : vector<256x16xbf16>, vector<16x32xbf16>, vector<256x32xf32> -> vector<256x32xf32>
    %c0_3 = arith.constant 0 : index
    %c0_4 = arith.constant 0 : index
    %4 = vector.load %arg4[%c0_3, %c0_4] : memref<1x32xf32, #tpu.memory_space<vmem>>, vector<1x32xf32>
    %5 = vector.broadcast %4 : vector<1x32xf32> to vector<256x32xf32>
    %6 = arith.addf %3, %5 : vector<256x32xf32>
    %cst_5 = arith.constant 0.000000e+00 : f32
    %7 = vector.broadcast %cst_5 : f32 to vector<256x32xf32>
    %8 = arith.maximumf %6, %7 : vector<256x32xf32>
    %9 = arith.truncf %8 : vector<256x32xf32> to vector<256x32xbf16>
    %c0_6 = arith.constant 0 : index
    %c0_7 = arith.constant 0 : index
    %10 = vector.load %arg5[%c0_6, %c0_7] : memref<32x256xbf16, #tpu.memory_space<vmem>>, vector<32x256xbf16>
    %cst_8 = arith.constant dense<0.000000e+00> : vector<256x256xf32>
    %11 = tpu.matmul %9, %10, %cst_8 {dimension_numbers = #tpu.dot_dimension_numbers<[1], [0], [0], [1], [0, 0, 1, 1], [], []>} : vector<256x32xbf16>, vector<32x256xbf16>, vector<256x256xf32> -> vector<256x256xf32>
    %c0_9 = arith.constant 0 : index
    %c0_10 = arith.constant 0 : index
    %12 = vector.load %arg6[%c0_9, %c0_10] : memref<1x256xf32, #tpu.memory_space<vmem>>, vector<1x256xf32>
    %13 = vector.broadcast %12 : vector<1x256xf32> to vector<256x256xf32>
    %14 = arith.addf %11, %13 : vector<256x256xf32>
    %cst_11 = arith.constant 0.000000e+00 : f32
    %15 = vector.broadcast %cst_11 : f32 to vector<256x256xf32>
    %16 = arith.maximumf %14, %15 : vector<256x256xf32>
    %17 = arith.truncf %16 : vector<256x256xf32> to vector<256x256xbf16>
    %c0_12 = arith.constant 0 : index
    %c0_13 = arith.constant 0 : index
    %18 = vector.load %arg7[%c0_12, %c0_13] : memref<256x32xbf16, #tpu.memory_space<vmem>>, vector<256x32xbf16>
    %cst_14 = arith.constant dense<0.000000e+00> : vector<256x32xf32>
    %19 = tpu.matmul %17, %18, %cst_14 {dimension_numbers = #tpu.dot_dimension_numbers<[1], [0], [0], [1], [0, 0, 1, 1], [], []>} : vector<256x256xbf16>, vector<256x32xbf16>, vector<256x32xf32> -> vector<256x32xf32>
    %c0_15 = arith.constant 0 : index
    %c0_16 = arith.constant 0 : index
    %20 = vector.load %arg8[%c0_15, %c0_16] : memref<1x32xf32, #tpu.memory_space<vmem>>, vector<1x32xf32>
    %21 = vector.broadcast %20 : vector<1x32xf32> to vector<256x32xf32>
    %22 = arith.addf %19, %21 : vector<256x32xf32>
    %cst_17 = arith.constant 0.000000e+00 : f32
    %23 = vector.broadcast %cst_17 : f32 to vector<256x32xf32>
    %24 = arith.maximumf %22, %23 : vector<256x32xf32>
    %25 = arith.truncf %24 : vector<256x32xf32> to vector<256x32xbf16>
    %c0_18 = arith.constant 0 : index
    %c0_19 = arith.constant 0 : index
    %26 = vector.load %arg9[%c0_18, %c0_19] : memref<32x128xbf16, #tpu.memory_space<vmem>>, vector<32x128xbf16>
    %cst_20 = arith.constant dense<0.000000e+00> : vector<256x128xf32>
    %27 = tpu.matmul %25, %26, %cst_20 {dimension_numbers = #tpu.dot_dimension_numbers<[1], [0], [0], [1], [0, 0, 1, 1], [], []>} : vector<256x32xbf16>, vector<32x128xbf16>, vector<256x128xf32> -> vector<256x128xf32>
    %c0_21 = arith.constant 0 : index
    %c0_22 = arith.constant 0 : index
    %28 = vector.load %arg10[%c0_21, %c0_22] : memref<1x128xf32, #tpu.memory_space<vmem>>, vector<1x128xf32>
    %29 = vector.broadcast %28 : vector<1x128xf32> to vector<256x128xf32>
    %30 = arith.addf %27, %29 : vector<256x128xf32>
    %31 = arith.negf %30 : vector<256x128xf32>
    %32 = math.exp %31 : vector<256x128xf32>
    %cst_23 = arith.constant 1.000000e+00 : f32
    %33 = vector.broadcast %cst_23 : f32 to vector<256x128xf32>
    %34 = arith.addf %33, %32 : vector<256x128xf32>
    %35 = arith.divf %33, %34 : vector<256x128xf32>
    %c0_24 = arith.constant 0 : index
    %c0_25 = arith.constant 0 : index
    %36 = vector.load %arg11[%c0_24, %c0_25] : memref<256x128xf32, #tpu.memory_space<vmem>>, vector<256x128xf32>
    tpu.vector_store %arg11[%c0_24, %c0_25], %35 {strides = array<i32>} : memref<256x128xf32, #tpu.memory_space<vmem>>, vector<256x128xf32>,
    return
  }
  func.func @transform_0(%arg0: i32, %arg1: memref<1xi32, #tpu.memory_space<smem>>) -> (i32, i32) {
    %c0_i32 = arith.constant 0 : i32
    %c0_i32_0 = arith.constant 0 : i32
    return %arg0, %c0_i32 : i32, i32
  }
  func.func @transform_1(%arg0: i32, %arg1: memref<1xi32, #tpu.memory_space<smem>>) -> (i32, i32) {
    %c0_i32 = arith.constant 0 : i32
    %c0_i32_0 = arith.constant 0 : i32
    %c0_i32_1 = arith.constant 0 : i32
    return %c0_i32, %c0_i32_0 : i32, i32
  }
  func.func @transform_2(%arg0: i32, %arg1: memref<1xi32, #tpu.memory_space<smem>>) -> (i32, i32) {
    %c0_i32 = arith.constant 0 : i32
    %c0_i32_0 = arith.constant 0 : i32
    %c0_i32_1 = arith.constant 0 : i32
    return %c0_i32, %c0_i32_0 : i32, i32
  }
  func.func @transform_3(%arg0: i32, %arg1: memref<1xi32, #tpu.memory_space<smem>>) -> (i32, i32) {
    %c0_i32 = arith.constant 0 : i32
    %c0_i32_0 = arith.constant 0 : i32
    %c0_i32_1 = arith.constant 0 : i32
    return %c0_i32, %c0_i32_0 : i32, i32
  }
  func.func @transform_4(%arg0: i32, %arg1: memref<1xi32, #tpu.memory_space<smem>>) -> (i32, i32) {
    %c0_i32 = arith.constant 0 : i32
    %c0_i32_0 = arith.constant 0 : i32
    %c0_i32_1 = arith.constant 0 : i32
    return %c0_i32, %c0_i32_0 : i32, i32
  }
  func.func @transform_5(%arg0: i32, %arg1: memref<1xi32, #tpu.memory_space<smem>>) -> (i32, i32) {
    %c0_i32 = arith.constant 0 : i32
    %c0_i32_0 = arith.constant 0 : i32
    %c0_i32_1 = arith.constant 0 : i32
    return %c0_i32, %c0_i32_0 : i32, i32
  }
  func.func @transform_6(%arg0: i32, %arg1: memref<1xi32, #tpu.memory_space<smem>>) -> (i32, i32) {
    %c0_i32 = arith.constant 0 : i32
    %c0_i32_0 = arith.constant 0 : i32
    %c0_i32_1 = arith.constant 0 : i32
    return %c0_i32, %c0_i32_0 : i32, i32
  }
  func.func @transform_7(%arg0: i32, %arg1: memref<1xi32, #tpu.memory_space<smem>>) -> (i32, i32) {
    %c0_i32 = arith.constant 0 : i32
    %c0_i32_0 = arith.constant 0 : i32
    %c0_i32_1 = arith.constant 0 : i32
    return %c0_i32, %c0_i32_0 : i32, i32
  }
  func.func @transform_8(%arg0: i32, %arg1: memref<1xi32, #tpu.memory_space<smem>>) -> (i32, i32) {
    %c0_i32 = arith.constant 0 : i32
    %c0_i32_0 = arith.constant 0 : i32
    %c0_i32_1 = arith.constant 0 : i32
    return %c0_i32, %c0_i32_0 : i32, i32
  }
  func.func @transform_9(%arg0: i32, %arg1: memref<1xi32, #tpu.memory_space<smem>>) -> (i32, i32) {
    %c0_i32 = arith.constant 0 : i32
    %c0_i32_0 = arith.constant 0 : i32
    return %arg0, %c0_i32 : i32, i32
  }
}

</mosaic_0001>

<llo_original>
// kernel: tpu_custom_call.1
$region0: #{tpu_custom_call.1}
  #allocation0 [shape = 'u32[]', space=smem, size = 0x4, offset = 0x4, fixed_abs, tag = 'smem constant byte address 0x4 - core index']
  #allocation1 [shape = 'u32[72,128]{1,0:T(1,128)}', space=vmem, size = 0x9000, scoped, tag = 'internal scratch']
  #allocation2 [shape = 's32[1]{0}', space=sflag, size = 0x4, scoped, tag = 'scoped memory for tpu_custom_call.1']
  #allocation3 [shape = 's32[1]{0:T(128)S(6)}', space=smem, size = 0x200, scoped, tag = 'prefetched SMEM operand 0']
  %s0 = inlined_call_operand.<no memory space> [shape: s32[1], index: 0, kind: input, shape index: {}]
  %s1 = inlined_call_operand.vmem [shape: f32[256,16], index: 1, kind: input, shape index: {}]
  %s2 = inlined_call_operand.vmem [shape: bf16[16,32], index: 2, kind: input, shape index: {}]
  %s3 = inlined_call_operand.vmem [shape: f32[1,32], index: 3, kind: input, shape index: {}]
  %s4 = inlined_call_operand.vmem [shape: bf16[32,256], index: 4, kind: input, shape index: {}]
  %s5 = inlined_call_operand.vmem [shape: f32[1,256], index: 5, kind: input, shape index: {}]
  %s6 = inlined_call_operand.vmem [shape: bf16[256,32], index: 6, kind: input, shape index: {}]
  %s7 = inlined_call_operand.vmem [shape: f32[1,32], index: 7, kind: input, shape index: {}]
  %s8 = inlined_call_operand.vmem [shape: bf16[32,128], index: 8, kind: input, shape index: {}]
  %s9 = inlined_call_operand.vmem [shape: f32[1,128], index: 9, kind: input, shape index: {}]
  %s10 = inlined_call_operand.hbm [shape: f32[256,128], index: 10, kind: output, shape index: {}]
  %s11 = sld [smem:[#allocation0]]
  $region46: #{tpu_custom_call.1} parent=0
    _
  %s13 = ssub.s32 1, %s11
  %s14 = scalar_select 0, %s13, %s11
  %15 = sst [smem:[#allocation3]] %s0
  $region1: #{tpu_custom_call.1} parent=0
    #allocation4 [shape = 'u8[131072]{0}', space=vmem, size = 0x20000, scoped, tag = 'output window, operand 0, single buffered']
    #allocation5 [shape = 's32[1]{0}', space=sflag, size = 0x4, scoped, tag = 'scoped memory for tpu_custom_call.1']
    %16 = vsyncpa [#allocation5], 0
    // Predicated region
    $region2: #{tpu_custom_call.1} parent=1 // pred_check
      _
    $region3: #{tpu_custom_call.1} parent=1 // pred_check_branch
      %18 = sbr.rel (0) target = $region5
    $region4: #{tpu_custom_call.1} parent=1 // pred_region
      _
    $region5: #{tpu_custom_call.1} parent=1 // pred_fallthru
      _
    // Predicated region
    $region6: #{tpu_custom_call.1} parent=1 // pred_check
      _
    $region7: #{tpu_custom_call.1} parent=1 // pred_check_branch
      %20 = sbr.rel (0) target = $region9
    $region8: #{tpu_custom_call.1} parent=1 // pred_region
      _
    $region9: #{tpu_custom_call.1} parent=1 // pred_fallthru
      _
    // Predicated region
    $region10: #{tpu_custom_call.1} parent=1 // pred_check
      _
    $region11: #{tpu_custom_call.1} parent=1 // pred_check_branch
      %22 = sbr.rel (0) target = $region13
    $region12: #{tpu_custom_call.1} parent=1 // pred_region
      _
    $region13: #{tpu_custom_call.1} parent=1 // pred_fallthru
      _
    // Predicated region
    $region14: #{tpu_custom_call.1} parent=1 // pred_check
      _
    $region15: #{tpu_custom_call.1} parent=1 // pred_check_branch
      %24 = sbr.rel (0) target = $region17
    $region16: #{tpu_custom_call.1} parent=1 // pred_region
      _
    $region17: #{tpu_custom_call.1} parent=1 // pred_fallthru
      _
    // Predicated region
    $region18: #{tpu_custom_call.1} parent=1 // pred_check
      _
    $region19: #{tpu_custom_call.1} parent=1 // pred_check_branch
      %26 = sbr.rel (0) target = $region21
    $region20: #{tpu_custom_call.1} parent=1 // pred_region
      _
    $region21: #{tpu_custom_call.1} parent=1 // pred_fallthru
      _
    // Predicated region
    $region22: #{tpu_custom_call.1} parent=1 // pred_check
      _
    $region23: #{tpu_custom_call.1} parent=1 // pred_check_branch
      %28 = sbr.rel (0) target = $region25
    $region24: #{tpu_custom_call.1} parent=1 // pred_region
      _
    $region25: #{tpu_custom_call.1} parent=1 // pred_fallthru
      _
    // Predicated region
    $region26: #{tpu_custom_call.1} parent=1 // pred_check
      _
    $region27: #{tpu_custom_call.1} parent=1 // pred_check_branch
      %30 = sbr.rel (0) target = $region29
    $region28: #{tpu_custom_call.1} parent=1 // pred_region
      _
    $region29: #{tpu_custom_call.1} parent=1 // pred_fallthru
      _
    // Predicated region
    $region30: #{tpu_custom_call.1} parent=1 // pred_check
      _
    $region31: #{tpu_custom_call.1} parent=1 // pred_check_branch
      %32 = sbr.rel (0) target = $region33
    $region32: #{tpu_custom_call.1} parent=1 // pred_region
      _
    $region33: #{tpu_custom_call.1} parent=1 // pred_fallthru
      _
    // Predicated region
    $region34: #{tpu_custom_call.1} parent=1 // pred_check
      _
    $region35: #{tpu_custom_call.1} parent=1 // pred_check_branch
      %34 = sbr.rel (0) target = $region37
    $region36: #{tpu_custom_call.1} parent=1 // pred_region
      _
    $region37: #{tpu_custom_call.1} parent=1 // pred_fallthru
      _
    %v36 = vld [vmem:[%s1] sm:$0xff]
    %v37 = vld [vmem:[%s1 + $0x8] sm:$0xff]
    %v38 = vld [vmem:[%s1 + $0x10] sm:$0xff]
    %v39 = vld [vmem:[%s1 + $0x18] sm:$0xff]
    %v40 = vld [vmem:[%s1 + $0x20] sm:$0xff]
    %v41 = vld [vmem:[%s1 + $0x28] sm:$0xff]
    %v42 = vld [vmem:[%s1 + $0x30] sm:$0xff]
    %v43 = vld [vmem:[%s1 + $0x38] sm:$0xff]
    %v44 = vld [vmem:[%s1 + $0x40] sm:$0xff]
    %v45 = vld [vmem:[%s1 + $0x48] sm:$0xff]
    %v46 = vld [vmem:[%s1 + $0x50] sm:$0xff]
    %v47 = vld [vmem:[%s1 + $0x58] sm:$0xff]
    %v48 = vld [vmem:[%s1 + $0x60] sm:$0xff]
    %v49 = vld [vmem:[%s1 + $0x68] sm:$0xff]
    %v50 = vld [vmem:[%s1 + $0x70] sm:$0xff]
    %v51 = vld [vmem:[%s1 + $0x78] sm:$0xff]
    %v52 = vld [vmem:[%s1 + $0x80] sm:$0xff]
    %v53 = vld [vmem:[%s1 + $0x88] sm:$0xff]
    %v54 = vld [vmem:[%s1 + $0x90] sm:$0xff]
    %v55 = vld [vmem:[%s1 + $0x98] sm:$0xff]
    %v56 = vld [vmem:[%s1 + $0xa0] sm:$0xff]
    %v57 = vld [vmem:[%s1 + $0xa8] sm:$0xff]
    %v58 = vld [vmem:[%s1 + $0xb0] sm:$0xff]
    %v59 = vld [vmem:[%s1 + $0xb8] sm:$0xff]
    %v60 = vld [vmem:[%s1 + $0xc0] sm:$0xff]
    %v61 = vld [vmem:[%s1 + $0xc8] sm:$0xff]
    %v62 = vld [vmem:[%s1 + $0xd0] sm:$0xff]
    %v63 = vld [vmem:[%s1 + $0xd8] sm:$0xff]
    %v64 = vld [vmem:[%s1 + $0xe0] sm:$0xff]
    %v65 = vld [vmem:[%s1 + $0xe8] sm:$0xff]
    %v66 = vld [vmem:[%s1 + $0xf0] sm:$0xff]
    %v67 = vld [vmem:[%s1 + $0xf8] sm:$0xff]
    %v68 = vpack.c.bf16 %v37, %v36
    %v69 = vpack.c.bf16 %v39, %v38
    %v70 = vpack.c.bf16 %v41, %v40
    %v71 = vpack.c.bf16 %v43, %v42
    %v72 = vpack.c.bf16 %v45, %v44
    %v73 = vpack.c.bf16 %v47, %v46
    %v74 = vpack.c.bf16 %v49, %v48
    %v75 = vpack.c.bf16 %v51, %v50
    %v76 = vpack.c.bf16 %v53, %v52
    %v77 = vpack.c.bf16 %v55, %v54
    %v78 = vpack.c.bf16 %v57, %v56
    %v79 = vpack.c.bf16 %v59, %v58
    %v80 = vpack.c.bf16 %v61, %v60
    %v81 = vpack.c.bf16 %v63, %v62
    %v82 = vpack.c.bf16 %v65, %v64
    %v83 = vpack.c.bf16 %v67, %v66
    %v84 = vld [vmem:[%s2] sm:$0xf]
    %v85 = vld [vmem:[%s2 + $0x4] sm:$0xf]
    %v86 = vld [vmem:[%s3] sm:$0x1]
    %v88 = vperm.slane %v86, 0
    %v92 = vunpack.c.l.b16 %v84
    %v93 = vunpack.c.l.b16 %v85
    %v94 = vpack.c.b16 %v93, %v92
    %vm96 = vcmask 130048
    %v98 = vsel %vm96, %v68, 0
    %v101 = vsel %vm96, %v69, 0
    %v104 = vsel %vm96, %v70, 0
    %v107 = vsel %vm96, %v71, 0
    %v110 = vsel %vm96, %v72, 0
    %v113 = vsel %vm96, %v73, 0
    %v116 = vsel %vm96, %v74, 0
    %v119 = vsel %vm96, %v75, 0
    %v122 = vsel %vm96, %v76, 0
    %v125 = vsel %vm96, %v77, 0
    %v128 = vsel %vm96, %v78, 0
    %v131 = vsel %vm96, %v79, 0
    %v134 = vsel %vm96, %v80, 0
    %v137 = vsel %vm96, %v81, 0
    %v140 = vsel %vm96, %v82, 0
    %v143 = vsel %vm96, %v83, 0
    %145 = vmatpush.bf16.msra.mxu0 0
    %146 = vmatpush.bf16.msra.mxu0 0
    %147 = vmatpush.bf16.msra.mxu0 0
    %148 = vmatpush.bf16.msra.mxu0 0
    %149 = vmatpush.bf16.msra.mxu0 0
    %150 = vmatpush.bf16.msra.mxu0 0
    %151 = vmatpush.bf16.msra.mxu0 0
    %152 = vmatpush.bf16.msra.mxu0 %v94
    %153 = vmatmul.bf16.gmra.mxu0 %v98
    %v154 = vpop.f32.mrf.mxu0
    %v155 = vadd.f32 %v88, %v154
    %v156 = vpop.f32.mrf.mxu0
    %v157 = vadd.f32 %v88, %v156
    %158 = vmatmul.bf16.gmra.mxu0 %v101
    %v159 = vpop.f32.mrf.mxu0
    %v160 = vadd.f32 %v88, %v159
    %v161 = vpop.f32.mrf.mxu0
    %v162 = vadd.f32 %v88, %v161
    %163 = vmatmul.bf16.gmra.mxu0 %v104
    %v164 = vpop.f32.mrf.mxu0
    %v165 = vadd.f32 %v88, %v164
    %v166 = vpop.f32.mrf.mxu0
    %v167 = vadd.f32 %v88, %v166
    %168 = vmatmul.bf16.gmra.mxu0 %v107
    %v169 = vpop.f32.mrf.mxu0
    %v170 = vadd.f32 %v88, %v169
    %v171 = vpop.f32.mrf.mxu0
    %v172 = vadd.f32 %v88, %v171
    %173 = vmatmul.bf16.gmra.mxu0 %v110
    %v174 = vpop.f32.mrf.mxu0
    %v175 = vadd.f32 %v88, %v174
    %v176 = vpop.f32.mrf.mxu0
    %v177 = vadd.f32 %v88, %v176
    %178 = vmatmul.bf16.gmra.mxu0 %v113
    %v179 = vpop.f32.mrf.mxu0
    %v180 = vadd.f32 %v88, %v179
    %v181 = vpop.f32.mrf.mxu0
    %v182 = vadd.f32 %v88, %v181
    %183 = vmatmul.bf16.gmra.mxu0 %v116
    %v184 = vpop.f32.mrf.mxu0
    %v185 = vadd.f32 %v88, %v184
    %v186 = vpop.f32.mrf.mxu0
    %v187 = vadd.f32 %v88, %v186
    %188 = vmatmul.bf16.gmra.mxu0 %v119
    %v189 = vpop.f32.mrf.mxu0
    %v190 = vadd.f32 %v88, %v189
    %v191 = vpop.f32.mrf.mxu0
    %v192 = vadd.f32 %v88, %v191
    %193 = vmatmul.bf16.gmra.mxu0 %v122
    %v194 = vpop.f32.mrf.mxu0
    %v195 = vadd.f32 %v88, %v194
    %v196 = vpop.f32.mrf.mxu0
    %v197 = vadd.f32 %v88, %v196
    %198 = vmatmul.bf16.gmra.mxu0 %v125
    %v199 = vpop.f32.mrf.mxu0
    %v200 = vadd.f32 %v88, %v199
    %v201 = vpop.f32.mrf.mxu0
    %v202 = vadd.f32 %v88, %v201
    %203 = vmatmul.bf16.gmra.mxu0 %v128
    %v204 = vpop.f32.mrf.mxu0
    %v205 = vadd.f32 %v88, %v204
    %v206 = vpop.f32.mrf.mxu0
    %v207 = vadd.f32 %v88, %v206
    %208 = vmatmul.bf16.gmra.mxu0 %v131
    %v209 = vpop.f32.mrf.mxu0
    %v210 = vadd.f32 %v88, %v209
    %v211 = vpop.f32.mrf.mxu0
    %v212 = vadd.f32 %v88, %v211
    %213 = vmatmul.bf16.gmra.mxu0 %v134
    %v214 = vpop.f32.mrf.mxu0
    %v215 = vadd.f32 %v88, %v214
    %v216 = vpop.f32.mrf.mxu0
    %v217 = vadd.f32 %v88, %v216
    %218 = vmatmul.bf16.gmra.mxu0 %v137
    %v219 = vpop.f32.mrf.mxu0
    %v220 = vadd.f32 %v88, %v219
    %v221 = vpop.f32.mrf.mxu0
    %v222 = vadd.f32 %v88, %v221
    %223 = vmatmul.bf16.gmra.mxu0 %v140
    %v224 = vpop.f32.mrf.mxu0
    %v225 = vadd.f32 %v88, %v224
    %v226 = vpop.f32.mrf.mxu0
    %v227 = vadd.f32 %v88, %v226
    %228 = vmatmul.bf16.gmra.mxu0 %v143
    %v229 = vpop.f32.mrf.mxu0
    %v230 = vadd.f32 %v88, %v229
    %v231 = vpop.f32.mrf.mxu0
    %v232 = vadd.f32 %v88, %v231
    %233 = vdwg.mxu0
    %v234 = vmax.f32 %v155, 0.0
    %v235 = vmax.f32 %v157, 0.0
    %v236 = vmax.f32 %v160, 0.0
    %v237 = vmax.f32 %v162, 0.0
    %v238 = vmax.f32 %v165, 0.0
    %v239 = vmax.f32 %v167, 0.0
    %v240 = vmax.f32 %v170, 0.0
    %v241 = vmax.f32 %v172, 0.0
    %v242 = vmax.f32 %v175, 0.0
    %v243 = vmax.f32 %v177, 0.0
    %v244 = vmax.f32 %v180, 0.0
    %v245 = vmax.f32 %v182, 0.0
    %v246 = vmax.f32 %v185, 0.0
    %v247 = vmax.f32 %v187, 0.0
    %v248 = vmax.f32 %v190, 0.0
    %v249 = vmax.f32 %v192, 0.0
    %v250 = vmax.f32 %v195, 0.0
    %v251 = vmax.f32 %v197, 0.0
    %v252 = vmax.f32 %v200, 0.0
    %v253 = vmax.f32 %v202, 0.0
    %v254 = vmax.f32 %v205, 0.0
    %v255 = vmax.f32 %v207, 0.0
    %v256 = vmax.f32 %v210, 0.0
    %v257 = vmax.f32 %v212, 0.0
    %v258 = vmax.f32 %v215, 0.0
    %v259 = vmax.f32 %v217, 0.0
    %v260 = vmax.f32 %v220, 0.0
    %v261 = vmax.f32 %v222, 0.0
    %v262 = vmax.f32 %v225, 0.0
    %v263 = vmax.f32 %v227, 0.0
    %v264 = vmax.f32 %v230, 0.0
    %v265 = vmax.f32 %v232, 0.0
    %v266 = vpack.c.bf16 %v235, %v234
    %v267 = vpack.c.bf16 %v237, %v236
    %v268 = vpack.c.bf16 %v239, %v238
    %v269 = vpack.c.bf16 %v241, %v240
    %v270 = vpack.c.bf16 %v243, %v242
    %v271 = vpack.c.bf16 %v245, %v244
    %v272 = vpack.c.bf16 %v247, %v246
    %v273 = vpack.c.bf16 %v249, %v248
    %v274 = vpack.c.bf16 %v251, %v250
    %v275 = vpack.c.bf16 %v253, %v252
    %v276 = vpack.c.bf16 %v255, %v254
    %v277 = vpack.c.bf16 %v257, %v256
    %v278 = vpack.c.bf16 %v259, %v258
    %v279 = vpack.c.bf16 %v261, %v260
    %v280 = vpack.c.bf16 %v263, %v262
    %v281 = vpack.c.bf16 %v265, %v264
    %v282 = vld [vmem:[%s4] sm:$0xff]
    %v283 = vld [vmem:[%s4 + $0x8] sm:$0xff]
    %v284 = vld [vmem:[%s4 + $0x10] sm:$0xff]
    %v285 = vld [vmem:[%s4 + $0x18] sm:$0xff]
    %v286 = vld [vmem:[%s5] sm:$0x3]
    %v288 = vperm.slane %v286, 0
    %v289 = vperm.slane %v286, 1
    %v296 = vunpack.c.l.b16 %v282
    %v297 = vunpack.c.h.b16 %v282
    %v298 = vunpack.c.l.b16 %v283
    %v299 = vunpack.c.h.b16 %v283
    %v300 = vunpack.c.l.b16 %v284
    %v301 = vunpack.c.h.b16 %v284
    %v302 = vunpack.c.l.b16 %v285
    %v303 = vunpack.c.h.b16 %v285
    %v304 = vpack.c.b16 %v298, %v296
    %v305 = vpack.c.b16 %v299, %v297
    %v306 = vpack.c.b16 %v302, %v300
    %v307 = vpack.c.b16 %v303, %v301
    %vm312 = vcmask 261120
    %v314 = vsel %vm312, %v266, 0
    %v317 = vsel %vm312, %v267, 0
    %v320 = vsel %vm312, %v268, 0
    %v323 = vsel %vm312, %v269, 0
    %v326 = vsel %vm312, %v270, 0
    %v329 = vsel %vm312, %v271, 0
    %v332 = vsel %vm312, %v272, 0
    %v335 = vsel %vm312, %v273, 0
    %v338 = vsel %vm312, %v274, 0
    %v341 = vsel %vm312, %v275, 0
    %v344 = vsel %vm312, %v276, 0
    %v347 = vsel %vm312, %v277, 0
    %v350 = vsel %vm312, %v278, 0
    %v353 = vsel %vm312, %v279, 0
    %v356 = vsel %vm312, %v280, 0
    %v359 = vsel %vm312, %v281, 0
    %361 = vmatpush.bf16.msra.mxu0 0
    %362 = vmatpush.bf16.msra.mxu0 0
    %363 = vmatpush.bf16.msra.mxu0 0
    %364 = vmatpush.bf16.msra.mxu0 0
    %365 = vmatpush.bf16.msra.mxu0 0
    %366 = vmatpush.bf16.msra.mxu0 0
    %367 = vmatpush.bf16.msra.mxu0 %v306
    %368 = vmatpush.bf16.msra.mxu0 %v304
    %369 = vmatmul.bf16.gmra.mxu0 %v314
    %v370 = vpop.f32.mrf.mxu0
    %v371 = vadd.f32 %v288, %v370
    %v372 = vpop.f32.mrf.mxu0
    %v373 = vadd.f32 %v288, %v372
    %374 = vmatmul.bf16.gmra.mxu0 %v317
    %v375 = vpop.f32.mrf.mxu0
    %v376 = vadd.f32 %v288, %v375
    %v377 = vpop.f32.mrf.mxu0
    %v378 = vadd.f32 %v288, %v377
    %379 = vmatmul.bf16.gmra.mxu0 %v320
    %v380 = vpop.f32.mrf.mxu0
    %v381 = vadd.f32 %v288, %v380
    %v382 = vpop.f32.mrf.mxu0
    %v383 = vadd.f32 %v288, %v382
    %384 = vmatmul.bf16.gmra.mxu0 %v323
    %v385 = vpop.f32.mrf.mxu0
    %v386 = vadd.f32 %v288, %v385
    %v387 = vpop.f32.mrf.mxu0
    %v388 = vadd.f32 %v288, %v387
    %389 = vmatmul.bf16.gmra.mxu0 %v326
    %v390 = vpop.f32.mrf.mxu0
    %v391 = vadd.f32 %v288, %v390
    %v392 = vpop.f32.mrf.mxu0
    %v393 = vadd.f32 %v288, %v392
    %394 = vmatmul.bf16.gmra.mxu0 %v329
    %v395 = vpop.f32.mrf.mxu0
    %v396 = vadd.f32 %v288, %v395
    %v397 = vpop.f32.mrf.mxu0
    %v398 = vadd.f32 %v288, %v397
    %399 = vmatmul.bf16.gmra.mxu0 %v332
    %v400 = vpop.f32.mrf.mxu0
    %v401 = vadd.f32 %v288, %v400
    %v402 = vpop.f32.mrf.mxu0
    %v403 = vadd.f32 %v288, %v402
    %404 = vmatmul.bf16.gmra.mxu0 %v335
    %v405 = vpop.f32.mrf.mxu0
    %v406 = vadd.f32 %v288, %v405
    %v407 = vpop.f32.mrf.mxu0
    %v408 = vadd.f32 %v288, %v407
    %409 = vmatmul.bf16.gmra.mxu0 %v338
    %v410 = vpop.f32.mrf.mxu0
    %v411 = vadd.f32 %v288, %v410
    %v412 = vpop.f32.mrf.mxu0
    %v413 = vadd.f32 %v288, %v412
    %414 = vmatmul.bf16.gmra.mxu0 %v341
    %v415 = vpop.f32.mrf.mxu0
    %v416 = vadd.f32 %v288, %v415
    %v417 = vpop.f32.mrf.mxu0
    %v418 = vadd.f32 %v288, %v417
    %419 = vmatmul.bf16.gmra.mxu0 %v344
    %v420 = vpop.f32.mrf.mxu0
    %v421 = vadd.f32 %v288, %v420
    %v422 = vpop.f32.mrf.mxu0
    %v423 = vadd.f32 %v288, %v422
    %424 = vmatmul.bf16.gmra.mxu0 %v347
    %v425 = vpop.f32.mrf.mxu0
    %v426 = vadd.f32 %v288, %v425
    %v427 = vpop.f32.mrf.mxu0
    %v428 = vadd.f32 %v288, %v427
    %429 = vmatmul.bf16.gmra.mxu0 %v350
    %v430 = vpop.f32.mrf.mxu0
    %v431 = vadd.f32 %v288, %v430
    %v432 = vpop.f32.mrf.mxu0
    %v433 = vadd.f32 %v288, %v432
    %434 = vmatmul.bf16.gmra.mxu0 %v353
    %v435 = vpop.f32.mrf.mxu0
    %v436 = vadd.f32 %v288, %v435
    %v437 = vpop.f32.mrf.mxu0
    %v438 = vadd.f32 %v288, %v437
    %439 = vmatmul.bf16.gmra.mxu0 %v356
    %v440 = vpop.f32.mrf.mxu0
    %v441 = vadd.f32 %v288, %v440
    %v442 = vpop.f32.mrf.mxu0
    %v443 = vadd.f32 %v288, %v442
    %444 = vmatmul.bf16.gmra.mxu0 %v359
    %v445 = vpop.f32.mrf.mxu0
    %v446 = vadd.f32 %v288, %v445
    %v447 = vpop.f32.mrf.mxu0
    %v448 = vadd.f32 %v288, %v447
    %449 = vdwg.mxu0
    %450 = vmatpush.bf16.msra.mxu0 0
    %451 = vmatpush.bf16.msra.mxu0 0
    %452 = vmatpush.bf16.msra.mxu0 0
    %453 = vmatpush.bf16.msra.mxu0 0
    %454 = vmatpush.bf16.msra.mxu0 0
    %455 = vmatpush.bf16.msra.mxu0 0
    %456 = vmatpush.bf16.msra.mxu0 %v307
    %457 = vmatpush.bf16.msra.mxu0 %v305
    %458 = vmatmul.bf16.gmra.mxu0 %v314
    %v459 = vpop.f32.mrf.mxu0
    %v460 = vadd.f32 %v289, %v459
    %v461 = vpop.f32.mrf.mxu0
    %v462 = vadd.f32 %v289, %v461
    %463 = vmatmul.bf16.gmra.mxu0 %v317
    %v464 = vpop.f32.mrf.mxu0
    %v465 = vadd.f32 %v289, %v464
    %v466 = vpop.f32.mrf.mxu0
    %v467 = vadd.f32 %v289, %v466
    %468 = vmatmul.bf16.gmra.mxu0 %v320
    %v469 = vpop.f32.mrf.mxu0
    %v470 = vadd.f32 %v289, %v469
    %v471 = vpop.f32.mrf.mxu0
    %v472 = vadd.f32 %v289, %v471
    %473 = vmatmul.bf16.gmra.mxu0 %v323
    %v474 = vpop.f32.mrf.mxu0
    %v475 = vadd.f32 %v289, %v474
    %v476 = vpop.f32.mrf.mxu0
    %v477 = vadd.f32 %v289, %v476
    %478 = vmatmul.bf16.gmra.mxu0 %v326
    %v479 = vpop.f32.mrf.mxu0
    %v480 = vadd.f32 %v289, %v479
    %v481 = vpop.f32.mrf.mxu0
    %v482 = vadd.f32 %v289, %v481
    %483 = vmatmul.bf16.gmra.mxu0 %v329
    %v484 = vpop.f32.mrf.mxu0
    %v485 = vadd.f32 %v289, %v484
    %v486 = vpop.f32.mrf.mxu0
    %v487 = vadd.f32 %v289, %v486
    %488 = vmatmul.bf16.gmra.mxu0 %v332
    %v489 = vpop.f32.mrf.mxu0
    %v490 = vadd.f32 %v289, %v489
    %v491 = vpop.f32.mrf.mxu0
    %v492 = vadd.f32 %v289, %v491
    %493 = vmatmul.bf16.gmra.mxu0 %v335
    %v494 = vpop.f32.mrf.mxu0
    %v495 = vadd.f32 %v289, %v494
    %v496 = vpop.f32.mrf.mxu0
    %v497 = vadd.f32 %v289, %v496
    %498 = vmatmul.bf16.gmra.mxu0 %v338
    %v499 = vpop.f32.mrf.mxu0
    %v500 = vadd.f32 %v289, %v499
    %v501 = vpop.f32.mrf.mxu0
    %v502 = vadd.f32 %v289, %v501
    %503 = vmatmul.bf16.gmra.mxu0 %v341
    %v504 = vpop.f32.mrf.mxu0
    %v505 = vadd.f32 %v289, %v504
    %v506 = vpop.f32.mrf.mxu0
    %v507 = vadd.f32 %v289, %v506
    %508 = vmatmul.bf16.gmra.mxu0 %v344
    %v509 = vpop.f32.mrf.mxu0
    %v510 = vadd.f32 %v289, %v509
    %v511 = vpop.f32.mrf.mxu0
    %v512 = vadd.f32 %v289, %v511
    %513 = vmatmul.bf16.gmra.mxu0 %v347
    %v514 = vpop.f32.mrf.mxu0
    %v515 = vadd.f32 %v289, %v514
    %v516 = vpop.f32.mrf.mxu0
    %v517 = vadd.f32 %v289, %v516
    %518 = vmatmul.bf16.gmra.mxu0 %v350
    %v519 = vpop.f32.mrf.mxu0
    %v520 = vadd.f32 %v289, %v519
    %v521 = vpop.f32.mrf.mxu0
    %v522 = vadd.f32 %v289, %v521
    %523 = vmatmul.bf16.gmra.mxu0 %v353
    %v524 = vpop.f32.mrf.mxu0
    %v525 = vadd.f32 %v289, %v524
    %v526 = vpop.f32.mrf.mxu0
    %v527 = vadd.f32 %v289, %v526
    %528 = vmatmul.bf16.gmra.mxu0 %v356
    %v529 = vpop.f32.mrf.mxu0
    %v530 = vadd.f32 %v289, %v529
    %v531 = vpop.f32.mrf.mxu0
    %v532 = vadd.f32 %v289, %v531
    %533 = vmatmul.bf16.gmra.mxu0 %v359
    %v534 = vpop.f32.mrf.mxu0
    %v535 = vadd.f32 %v289, %v534
    %v536 = vpop.f32.mrf.mxu0
    %v537 = vadd.f32 %v289, %v536
    %538 = vdwg.mxu0
    %v539 = vmax.f32 %v371, 0.0
    %v540 = vmax.f32 %v460, 0.0
    %v541 = vmax.f32 %v373, 0.0
    %v542 = vmax.f32 %v462, 0.0
    %v543 = vmax.f32 %v376, 0.0
    %v544 = vmax.f32 %v465, 0.0
    %v545 = vmax.f32 %v378, 0.0
    %v546 = vmax.f32 %v467, 0.0
    %v547 = vmax.f32 %v381, 0.0
    %v548 = vmax.f32 %v470, 0.0
    %v549 = vmax.f32 %v383, 0.0
    %v550 = vmax.f32 %v472, 0.0
    %v551 = vmax.f32 %v386, 0.0
    %v552 = vmax.f32 %v475, 0.0
    %v553 = vmax.f32 %v388, 0.0
    %v554 = vmax.f32 %v477, 0.0
    %v555 = vmax.f32 %v391, 0.0
    %v556 = vmax.f32 %v480, 0.0
    %v557 = vmax.f32 %v393, 0.0
    %v558 = vmax.f32 %v482, 0.0
    %v559 = vmax.f32 %v396, 0.0
    %v560 = vmax.f32 %v485, 0.0
    %v561 = vmax.f32 %v398, 0.0
    %v562 = vmax.f32 %v487, 0.0
    %v563 = vmax.f32 %v401, 0.0
    %v564 = vmax.f32 %v490, 0.0
    %v565 = vmax.f32 %v403, 0.0
    %v566 = vmax.f32 %v492, 0.0
    %v567 = vmax.f32 %v406, 0.0
    %v568 = vmax.f32 %v495, 0.0
    %v569 = vmax.f32 %v408, 0.0
    %v570 = vmax.f32 %v497, 0.0
    %v571 = vmax.f32 %v411, 0.0
    %v572 = vmax.f32 %v500, 0.0
    %v573 = vmax.f32 %v413, 0.0
    %v574 = vmax.f32 %v502, 0.0
    %v575 = vmax.f32 %v416, 0.0
    %v576 = vmax.f32 %v505, 0.0
    %v577 = vmax.f32 %v418, 0.0
    %v578 = vmax.f32 %v507, 0.0
    %v579 = vmax.f32 %v421, 0.0
    %v580 = vmax.f32 %v510, 0.0
    %v581 = vmax.f32 %v423, 0.0
    %v582 = vmax.f32 %v512, 0.0
    %v583 = vmax.f32 %v426, 0.0
    %v584 = vmax.f32 %v515, 0.0
    %v585 = vmax.f32 %v428, 0.0
    %v586 = vmax.f32 %v517, 0.0
    %v587 = vmax.f32 %v431, 0.0
    %v588 = vmax.f32 %v520, 0.0
    %v589 = vmax.f32 %v433, 0.0
    %v590 = vmax.f32 %v522, 0.0
    %v591 = vmax.f32 %v436, 0.0
    %v592 = vmax.f32 %v525, 0.0
    %v593 = vmax.f32 %v438, 0.0
    %v594 = vmax.f32 %v527, 0.0
    %v595 = vmax.f32 %v441, 0.0
    %v596 = vmax.f32 %v530, 0.0
    %v597 = vmax.f32 %v443, 0.0
    %v598 = vmax.f32 %v532, 0.0
    %v599 = vmax.f32 %v446, 0.0
    %v600 = vmax.f32 %v535, 0.0
    %v601 = vmax.f32 %v448, 0.0
    %v602 = vmax.f32 %v537, 0.0
    %v603 = vpack.c.bf16 %v541, %v539
    %v604 = vpack.c.bf16 %v542, %v540
    %v605 = vpack.c.bf16 %v545, %v543
    %v606 = vpack.c.bf16 %v546, %v544
    %v607 = vpack.c.bf16 %v549, %v547
    %v608 = vpack.c.bf16 %v550, %v548
    %v609 = vpack.c.bf16 %v553, %v551
    %v610 = vpack.c.bf16 %v554, %v552
    %v611 = vpack.c.bf16 %v557, %v555
    %v612 = vpack.c.bf16 %v558, %v556
    %v613 = vpack.c.bf16 %v561, %v559
    %v614 = vpack.c.bf16 %v562, %v560
    %v615 = vpack.c.bf16 %v565, %v563
    %v616 = vpack.c.bf16 %v566, %v564
    %v617 = vpack.c.bf16 %v569, %v567
    %v618 = vpack.c.bf16 %v570, %v568
    %v619 = vpack.c.bf16 %v573, %v571
    %v620 = vpack.c.bf16 %v574, %v572
    %v621 = vpack.c.bf16 %v577, %v575
    %v622 = vpack.c.bf16 %v578, %v576
    %v623 = vpack.c.bf16 %v581, %v579
    %v624 = vpack.c.bf16 %v582, %v580
    %v625 = vpack.c.bf16 %v585, %v583
    %v626 = vpack.c.bf16 %v586, %v584
    %v627 = vpack.c.bf16 %v589, %v587
    %v628 = vpack.c.bf16 %v590, %v588
    %v629 = vpack.c.bf16 %v593, %v591
    %v630 = vpack.c.bf16 %v594, %v592
    %v631 = vpack.c.bf16 %v597, %v595
    %v632 = vpack.c.bf16 %v598, %v596
    %v633 = vpack.c.bf16 %v601, %v599
    %v634 = vpack.c.bf16 %v602, %v600
    %v635 = vld [vmem:[%s6] sm:$0xf]
    %v636 = vld [vmem:[%s6 + $0x4] sm:$0xf]
    %v637 = vld [vmem:[%s6 + $0x8] sm:$0xf]
    %v638 = vld [vmem:[%s6 + $0xc] sm:$0xf]
    %v639 = vld [vmem:[%s6 + $0x10] sm:$0xf]
    %v640 = vld [vmem:[%s6 + $0x14] sm:$0xf]
    %v641 = vld [vmem:[%s6 + $0x18] sm:$0xf]
    %v642 = vld [vmem:[%s6 + $0x1c] sm:$0xf]
    %v643 = vld [vmem:[%s6 + $0x20] sm:$0xf]
    %v644 = vld [vmem:[%s6 + $0x24] sm:$0xf]
    %v645 = vld [vmem:[%s6 + $0x28] sm:$0xf]
    %v646 = vld [vmem:[%s6 + $0x2c] sm:$0xf]
    %v647 = vld [vmem:[%s6 + $0x30] sm:$0xf]
    %v648 = vld [vmem:[%s6 + $0x34] sm:$0xf]
    %v649 = vld [vmem:[%s6 + $0x38] sm:$0xf]
    %v650 = vld [vmem:[%s6 + $0x3c] sm:$0xf]
    %v651 = vld [vmem:[%s6 + $0x40] sm:$0xf]
    %v652 = vld [vmem:[%s6 + $0x44] sm:$0xf]
    %v653 = vld [vmem:[%s6 + $0x48] sm:$0xf]
    %v654 = vld [vmem:[%s6 + $0x4c] sm:$0xf]
    %v655 = vld [vmem:[%s6 + $0x50] sm:$0xf]
    %v656 = vld [vmem:[%s6 + $0x54] sm:$0xf]
    %v657 = vld [vmem:[%s6 + $0x58] sm:$0xf]
    %v658 = vld [vmem:[%s6 + $0x5c] sm:$0xf]
    %v659 = vld [vmem:[%s6 + $0x60] sm:$0xf]
    %v660 = vld [vmem:[%s6 + $0x64] sm:$0xf]
    %v661 = vld [vmem:[%s6 + $0x68] sm:$0xf]
    %v662 = vld [vmem:[%s6 + $0x6c] sm:$0xf]
    %v663 = vld [vmem:[%s6 + $0x70] sm:$0xf]
    %v664 = vld [vmem:[%s6 + $0x74] sm:$0xf]
    %v665 = vld [vmem:[%s6 + $0x78] sm:$0xf]
    %v666 = vld [vmem:[%s6 + $0x7c] sm:$0xf]
    %v667 = vld [vmem:[%s7] sm:$0x1]
    %v669 = vperm.slane %v667, 0
    %v703 = vunpack.c.l.b16 %v635
    %v704 = vunpack.c.l.b16 %v636
    %v705 = vunpack.c.l.b16 %v637
    %v706 = vunpack.c.l.b16 %v638
    %v707 = vunpack.c.l.b16 %v639
    %v708 = vunpack.c.l.b16 %v640
    %v709 = vunpack.c.l.b16 %v641
    %v710 = vunpack.c.l.b16 %v642
    %v711 = vunpack.c.l.b16 %v643
    %v712 = vunpack.c.l.b16 %v644
    %v713 = vunpack.c.l.b16 %v645
    %v714 = vunpack.c.l.b16 %v646
    %v715 = vunpack.c.l.b16 %v647
    %v716 = vunpack.c.l.b16 %v648
    %v717 = vunpack.c.l.b16 %v649
    %v718 = vunpack.c.l.b16 %v650
    %v719 = vunpack.c.l.b16 %v651
    %v720 = vunpack.c.l.b16 %v652
    %v721 = vunpack.c.l.b16 %v653
    %v722 = vunpack.c.l.b16 %v654
    %v723 = vunpack.c.l.b16 %v655
    %v724 = vunpack.c.l.b16 %v656
    %v725 = vunpack.c.l.b16 %v657
    %v726 = vunpack.c.l.b16 %v658
    %v727 = vunpack.c.l.b16 %v659
    %v728 = vunpack.c.l.b16 %v660
    %v729 = vunpack.c.l.b16 %v661
    %v730 = vunpack.c.l.b16 %v662
    %v731 = vunpack.c.l.b16 %v663
    %v732 = vunpack.c.l.b16 %v664
    %v733 = vunpack.c.l.b16 %v665
    %v734 = vunpack.c.l.b16 %v666
    %v735 = vpack.c.b16 %v704, %v703
    %v736 = vpack.c.b16 %v706, %v705
    %v737 = vpack.c.b16 %v708, %v707
    %v738 = vpack.c.b16 %v710, %v709
    %v739 = vpack.c.b16 %v712, %v711
    %v740 = vpack.c.b16 %v714, %v713
    %v741 = vpack.c.b16 %v716, %v715
    %v742 = vpack.c.b16 %v718, %v717
    %v743 = vpack.c.b16 %v720, %v719
    %v744 = vpack.c.b16 %v722, %v721
    %v745 = vpack.c.b16 %v724, %v723
    %v746 = vpack.c.b16 %v726, %v725
    %v747 = vpack.c.b16 %v728, %v727
    %v748 = vpack.c.b16 %v730, %v729
    %v749 = vpack.c.b16 %v732, %v731
    %v750 = vpack.c.b16 %v734, %v733
    %767 = vmatpush.bf16.msra.mxu0 %v742
    %768 = vmatpush.bf16.msra.mxu0 %v741
    %769 = vmatpush.bf16.msra.mxu0 %v740
    %770 = vmatpush.bf16.msra.mxu0 %v739
    %771 = vmatpush.bf16.msra.mxu0 %v738
    %772 = vmatpush.bf16.msra.mxu0 %v737
    %773 = vmatpush.bf16.msra.mxu0 %v736
    %774 = vmatpush.bf16.msra.mxu0 %v735
    %775 = vmatmul.bf16.gmra.mxu0 %v603
    %v776 = vpop.f32.mrf.mxu0
    %v777 = vadd.f32 %v669, %v776
    %v778 = vpop.f32.mrf.mxu0
    %v779 = vadd.f32 %v669, %v778
    %780 = vmatmul.bf16.gmra.mxu0 %v605
    %v781 = vpop.f32.mrf.mxu0
    %v782 = vadd.f32 %v669, %v781
    %v783 = vpop.f32.mrf.mxu0
    %v784 = vadd.f32 %v669, %v783
    %785 = vmatmul.bf16.gmra.mxu0 %v607
    %v786 = vpop.f32.mrf.mxu0
    %v787 = vadd.f32 %v669, %v786
    %v788 = vpop.f32.mrf.mxu0
    %v789 = vadd.f32 %v669, %v788
    %790 = vmatmul.bf16.gmra.mxu0 %v609
    %v791 = vpop.f32.mrf.mxu0
    %v792 = vadd.f32 %v669, %v791
    %v793 = vpop.f32.mrf.mxu0
    %v794 = vadd.f32 %v669, %v793
    %795 = vmatmul.bf16.gmra.mxu0 %v611
    %v796 = vpop.f32.mrf.mxu0
    %v797 = vadd.f32 %v669, %v796
    %v798 = vpop.f32.mrf.mxu0
    %v799 = vadd.f32 %v669, %v798
    %800 = vmatmul.bf16.gmra.mxu0 %v613
    %v801 = vpop.f32.mrf.mxu0
    %v802 = vadd.f32 %v669, %v801
    %v803 = vpop.f32.mrf.mxu0
    %v804 = vadd.f32 %v669, %v803
    %805 = vmatmul.bf16.gmra.mxu0 %v615
    %v806 = vpop.f32.mrf.mxu0
    %v807 = vadd.f32 %v669, %v806
    %v808 = vpop.f32.mrf.mxu0
    %v809 = vadd.f32 %v669, %v808
    %810 = vmatmul.bf16.gmra.mxu0 %v617
    %v811 = vpop.f32.mrf.mxu0
    %v812 = vadd.f32 %v669, %v811
    %v813 = vpop.f32.mrf.mxu0
    %v814 = vadd.f32 %v669, %v813
    %815 = vmatmul.bf16.gmra.mxu0 %v619
    %v816 = vpop.f32.mrf.mxu0
    %v817 = vadd.f32 %v669, %v816
    %v818 = vpop.f32.mrf.mxu0
    %v819 = vadd.f32 %v669, %v818
    %820 = vmatmul.bf16.gmra.mxu0 %v621
    %v821 = vpop.f32.mrf.mxu0
    %v822 = vadd.f32 %v669, %v821
    %v823 = vpop.f32.mrf.mxu0
    %v824 = vadd.f32 %v669, %v823
    %825 = vmatmul.bf16.gmra.mxu0 %v623
    %v826 = vpop.f32.mrf.mxu0
    %v827 = vadd.f32 %v669, %v826
    %v828 = vpop.f32.mrf.mxu0
    %v829 = vadd.f32 %v669, %v828
    %830 = vmatmul.bf16.gmra.mxu0 %v625
    %v831 = vpop.f32.mrf.mxu0
    %v832 = vadd.f32 %v669, %v831
    %v833 = vpop.f32.mrf.mxu0
    %v834 = vadd.f32 %v669, %v833
    %835 = vmatmul.bf16.gmra.mxu0 %v627
    %v836 = vpop.f32.mrf.mxu0
    %v837 = vadd.f32 %v669, %v836
    %v838 = vpop.f32.mrf.mxu0
    %v839 = vadd.f32 %v669, %v838
    %840 = vmatmul.bf16.gmra.mxu0 %v629
    %v841 = vpop.f32.mrf.mxu0
    %v842 = vadd.f32 %v669, %v841
    %v843 = vpop.f32.mrf.mxu0
    %v844 = vadd.f32 %v669, %v843
    %845 = vmatmul.bf16.gmra.mxu0 %v631
    %v846 = vpop.f32.mrf.mxu0
    %v847 = vadd.f32 %v669, %v846
    %v848 = vpop.f32.mrf.mxu0
    %v849 = vadd.f32 %v669, %v848
    %850 = vmatmul.bf16.gmra.mxu0 %v633
    %v851 = vpop.f32.mrf.mxu0
    %v852 = vadd.f32 %v669, %v851
    %v853 = vpop.f32.mrf.mxu0
    %v854 = vadd.f32 %v669, %v853
    %855 = vdwg.mxu0
    %856 = vmatpush.bf16.msra.mxu0 %v750
    %857 = vmatpush.bf16.msra.mxu0 %v749
    %858 = vmatpush.bf16.msra.mxu0 %v748
    %859 = vmatpush.bf16.msra.mxu0 %v747
    %860 = vmatpush.bf16.msra.mxu0 %v746
    %861 = vmatpush.bf16.msra.mxu0 %v745
    %862 = vmatpush.bf16.msra.mxu0 %v744
    %863 = vmatpush.bf16.msra.mxu0 %v743
    %864 = vmatmul.bf16.gmra.mxu0 %v604
    %v865 = vpop.f32.mrf.mxu0
    %v866 = vadd.f32 %v777, %v865
    %v867 = vpop.f32.mrf.mxu0
    %v868 = vadd.f32 %v779, %v867
    %869 = vmatmul.bf16.gmra.mxu0 %v606
    %v870 = vpop.f32.mrf.mxu0
    %v871 = vadd.f32 %v782, %v870
    %v872 = vpop.f32.mrf.mxu0
    %v873 = vadd.f32 %v784, %v872
    %874 = vmatmul.bf16.gmra.mxu0 %v608
    %v875 = vpop.f32.mrf.mxu0
    %v876 = vadd.f32 %v787, %v875
    %v877 = vpop.f32.mrf.mxu0
    %v878 = vadd.f32 %v789, %v877
    %879 = vmatmul.bf16.gmra.mxu0 %v610
    %v880 = vpop.f32.mrf.mxu0
    %v881 = vadd.f32 %v792, %v880
    %v882 = vpop.f32.mrf.mxu0
    %v883 = vadd.f32 %v794, %v882
    %884 = vmatmul.bf16.gmra.mxu0 %v612
    %v885 = vpop.f32.mrf.mxu0
    %v886 = vadd.f32 %v797, %v885
    %v887 = vpop.f32.mrf.mxu0
    %v888 = vadd.f32 %v799, %v887
    %889 = vmatmul.bf16.gmra.mxu0 %v614
    %v890 = vpop.f32.mrf.mxu0
    %v891 = vadd.f32 %v802, %v890
    %v892 = vpop.f32.mrf.mxu0
    %v893 = vadd.f32 %v804, %v892
    %894 = vmatmul.bf16.gmra.mxu0 %v616
    %v895 = vpop.f32.mrf.mxu0
    %v896 = vadd.f32 %v807, %v895
    %v897 = vpop.f32.mrf.mxu0
    %v898 = vadd.f32 %v809, %v897
    %899 = vmatmul.bf16.gmra.mxu0 %v618
    %v900 = vpop.f32.mrf.mxu0
    %v901 = vadd.f32 %v812, %v900
    %v902 = vpop.f32.mrf.mxu0
    %v903 = vadd.f32 %v814, %v902
    %904 = vmatmul.bf16.gmra.mxu0 %v620
    %v905 = vpop.f32.mrf.mxu0
    %v906 = vadd.f32 %v817, %v905
    %v907 = vpop.f32.mrf.mxu0
    %v908 = vadd.f32 %v819, %v907
    %909 = vmatmul.bf16.gmra.mxu0 %v622
    %v910 = vpop.f32.mrf.mxu0
    %v911 = vadd.f32 %v822, %v910
    %v912 = vpop.f32.mrf.mxu0
    %v913 = vadd.f32 %v824, %v912
    %914 = vmatmul.bf16.gmra.mxu0 %v624
    %v915 = vpop.f32.mrf.mxu0
    %v916 = vadd.f32 %v827, %v915
    %v917 = vpop.f32.mrf.mxu0
    %v918 = vadd.f32 %v829, %v917
    %919 = vmatmul.bf16.gmra.mxu0 %v626
    %v920 = vpop.f32.mrf.mxu0
    %v921 = vadd.f32 %v832, %v920
    %v922 = vpop.f32.mrf.mxu0
    %v923 = vadd.f32 %v834, %v922
    %924 = vmatmul.bf16.gmra.mxu0 %v628
    %v925 = vpop.f32.mrf.mxu0
    %v926 = vadd.f32 %v837, %v925
    %v927 = vpop.f32.mrf.mxu0
    %v928 = vadd.f32 %v839, %v927
    %929 = vmatmul.bf16.gmra.mxu0 %v630
    %v930 = vpop.f32.mrf.mxu0
    %v931 = vadd.f32 %v842, %v930
    %v932 = vpop.f32.mrf.mxu0
    %v933 = vadd.f32 %v844, %v932
    %934 = vmatmul.bf16.gmra.mxu0 %v632
    %v935 = vpop.f32.mrf.mxu0
    %v936 = vadd.f32 %v847, %v935
    %v937 = vpop.f32.mrf.mxu0
    %v938 = vadd.f32 %v849, %v937
    %939 = vmatmul.bf16.gmra.mxu0 %v634
    %v940 = vpop.f32.mrf.mxu0
    %v941 = vadd.f32 %v852, %v940
    %v942 = vpop.f32.mrf.mxu0
    %v943 = vadd.f32 %v854, %v942
    %944 = vdwg.mxu0
    %v945 = vmax.f32 %v866, 0.0
    %v946 = vmax.f32 %v868, 0.0
    %v947 = vmax.f32 %v871, 0.0
    %v948 = vmax.f32 %v873, 0.0
    %v949 = vmax.f32 %v876, 0.0
    %v950 = vmax.f32 %v878, 0.0
    %v951 = vmax.f32 %v881, 0.0
    %v952 = vmax.f32 %v883, 0.0
    %v953 = vmax.f32 %v886, 0.0
    %v954 = vmax.f32 %v888, 0.0
    %v955 = vmax.f32 %v891, 0.0
    %v956 = vmax.f32 %v893, 0.0
    %v957 = vmax.f32 %v896, 0.0
    %v958 = vmax.f32 %v898, 0.0
    %v959 = vmax.f32 %v901, 0.0
    %v960 = vmax.f32 %v903, 0.0
    %v961 = vmax.f32 %v906, 0.0
    %v962 = vmax.f32 %v908, 0.0
    %v963 = vmax.f32 %v911, 0.0
    %v964 = vmax.f32 %v913, 0.0
    %v965 = vmax.f32 %v916, 0.0
    %v966 = vmax.f32 %v918, 0.0
    %v967 = vmax.f32 %v921, 0.0
    %v968 = vmax.f32 %v923, 0.0
    %v969 = vmax.f32 %v926, 0.0
    %v970 = vmax.f32 %v928, 0.0
    %v971 = vmax.f32 %v931, 0.0
    %v972 = vmax.f32 %v933, 0.0
    %v973 = vmax.f32 %v936, 0.0
    %v974 = vmax.f32 %v938, 0.0
    %v975 = vmax.f32 %v941, 0.0
    %v976 = vmax.f32 %v943, 0.0
    %v977 = vpack.c.bf16 %v946, %v945
    %v978 = vpack.c.bf16 %v948, %v947
    %v979 = vpack.c.bf16 %v950, %v949
    %v980 = vpack.c.bf16 %v952, %v951
    %v981 = vpack.c.bf16 %v954, %v953
    %v982 = vpack.c.bf16 %v956, %v955
    %v983 = vpack.c.bf16 %v958, %v957
    %v984 = vpack.c.bf16 %v960, %v959
    %v985 = vpack.c.bf16 %v962, %v961
    %v986 = vpack.c.bf16 %v964, %v963
    %v987 = vpack.c.bf16 %v966, %v965
    %v988 = vpack.c.bf16 %v968, %v967
    %v989 = vpack.c.bf16 %v970, %v969
    %v990 = vpack.c.bf16 %v972, %v971
    %v991 = vpack.c.bf16 %v974, %v973
    %v992 = vpack.c.bf16 %v976, %v975
    %v993 = vld [vmem:[%s8] sm:$0xf]
    %v994 = vld [vmem:[%s8 + $0x4] sm:$0xf]
    %v995 = vld [vmem:[%s8 + $0x8] sm:$0xf]
    %v996 = vld [vmem:[%s8 + $0xc] sm:$0xf]
    %v997 = vld [vmem:[%s9] sm:$0x1]
    %v999 = vperm.slane %v997, 0
    %v1005 = vunpack.c.l.b16 %v993
    %v1006 = vunpack.c.l.b16 %v994
    %v1007 = vunpack.c.l.b16 %v995
    %v1008 = vunpack.c.l.b16 %v996
    %v1009 = vpack.c.b16 %v1006, %v1005
    %v1010 = vpack.c.b16 %v1008, %v1007
    %v1014 = vsel %vm312, %v977, 0
    %v1017 = vsel %vm312, %v978, 0
    %v1020 = vsel %vm312, %v979, 0
    %v1023 = vsel %vm312, %v980, 0
    %v1026 = vsel %vm312, %v981, 0
    %v1029 = vsel %vm312, %v982, 0
    %v1032 = vsel %vm312, %v983, 0
    %v1035 = vsel %vm312, %v984, 0
    %v1038 = vsel %vm312, %v985, 0
    %v1041 = vsel %vm312, %v986, 0
    %v1044 = vsel %vm312, %v987, 0
    %v1047 = vsel %vm312, %v988, 0
    %v1050 = vsel %vm312, %v989, 0
    %v1053 = vsel %vm312, %v990, 0
    %v1056 = vsel %vm312, %v991, 0
    %v1059 = vsel %vm312, %v992, 0
    %1061 = vmatpush.bf16.msra.mxu0 0
    %1062 = vmatpush.bf16.msra.mxu0 0
    %1063 = vmatpush.bf16.msra.mxu0 0
    %1064 = vmatpush.bf16.msra.mxu0 0
    %1065 = vmatpush.bf16.msra.mxu0 0
    %1066 = vmatpush.bf16.msra.mxu0 0
    %1067 = vmatpush.bf16.msra.mxu0 %v1010
    %1068 = vmatpush.bf16.msra.mxu0 %v1009
    %1069 = vmatmul.bf16.gmra.mxu0 %v1014
    %v1070 = vpop.f32.mrf.mxu0
    %v1071 = vadd.f32 %v999, %v1070
    %v1072 = vpop.f32.mrf.mxu0
    %v1073 = vadd.f32 %v999, %v1072
    %1074 = vmatmul.bf16.gmra.mxu0 %v1017
    %v1075 = vpop.f32.mrf.mxu0
    %v1076 = vadd.f32 %v999, %v1075
    %v1077 = vpop.f32.mrf.mxu0
    %v1078 = vadd.f32 %v999, %v1077
    %1079 = vmatmul.bf16.gmra.mxu0 %v1020
    %v1080 = vpop.f32.mrf.mxu0
    %v1081 = vadd.f32 %v999, %v1080
    %v1082 = vpop.f32.mrf.mxu0
    %v1083 = vadd.f32 %v999, %v1082
    %1084 = vmatmul.bf16.gmra.mxu0 %v1023
    %v1085 = vpop.f32.mrf.mxu0
    %v1086 = vadd.f32 %v999, %v1085
    %v1087 = vpop.f32.mrf.mxu0
    %v1088 = vadd.f32 %v999, %v1087
    %1089 = vmatmul.bf16.gmra.mxu0 %v1026
    %v1090 = vpop.f32.mrf.mxu0
    %v1091 = vadd.f32 %v999, %v1090
    %v1092 = vpop.f32.mrf.mxu0
    %v1093 = vadd.f32 %v999, %v1092
    %1094 = vmatmul.bf16.gmra.mxu0 %v1029
    %v1095 = vpop.f32.mrf.mxu0
    %v1096 = vadd.f32 %v999, %v1095
    %v1097 = vpop.f32.mrf.mxu0
    %v1098 = vadd.f32 %v999, %v1097
    %1099 = vmatmul.bf16.gmra.mxu0 %v1032
    %v1100 = vpop.f32.mrf.mxu0
    %v1101 = vadd.f32 %v999, %v1100
    %v1102 = vpop.f32.mrf.mxu0
    %v1103 = vadd.f32 %v999, %v1102
    %1104 = vmatmul.bf16.gmra.mxu0 %v1035
    %v1105 = vpop.f32.mrf.mxu0
    %v1106 = vadd.f32 %v999, %v1105
    %v1107 = vpop.f32.mrf.mxu0
    %v1108 = vadd.f32 %v999, %v1107
    %1109 = vmatmul.bf16.gmra.mxu0 %v1038
    %v1110 = vpop.f32.mrf.mxu0
    %v1111 = vadd.f32 %v999, %v1110
    %v1112 = vpop.f32.mrf.mxu0
    %v1113 = vadd.f32 %v999, %v1112
    %1114 = vmatmul.bf16.gmra.mxu0 %v1041
    %v1115 = vpop.f32.mrf.mxu0
    %v1116 = vadd.f32 %v999, %v1115
    %v1117 = vpop.f32.mrf.mxu0
    %v1118 = vadd.f32 %v999, %v1117
    %1119 = vmatmul.bf16.gmra.mxu0 %v1044
    %v1120 = vpop.f32.mrf.mxu0
    %v1121 = vadd.f32 %v999, %v1120
    %v1122 = vpop.f32.mrf.mxu0
    %v1123 = vadd.f32 %v999, %v1122
    %1124 = vmatmul.bf16.gmra.mxu0 %v1047
    %v1125 = vpop.f32.mrf.mxu0
    %v1126 = vadd.f32 %v999, %v1125
    %v1127 = vpop.f32.mrf.mxu0
    %v1128 = vadd.f32 %v999, %v1127
    %1129 = vmatmul.bf16.gmra.mxu0 %v1050
    %v1130 = vpop.f32.mrf.mxu0
    %v1131 = vadd.f32 %v999, %v1130
    %v1132 = vpop.f32.mrf.mxu0
    %v1133 = vadd.f32 %v999, %v1132
    %1134 = vmatmul.bf16.gmra.mxu0 %v1053
    %v1135 = vpop.f32.mrf.mxu0
    %v1136 = vadd.f32 %v999, %v1135
    %v1137 = vpop.f32.mrf.mxu0
    %v1138 = vadd.f32 %v999, %v1137
    %1139 = vmatmul.bf16.gmra.mxu0 %v1056
    %v1140 = vpop.f32.mrf.mxu0
    %v1141 = vadd.f32 %v999, %v1140
    %v1142 = vpop.f32.mrf.mxu0
    %v1143 = vadd.f32 %v999, %v1142
    %1144 = vmatmul.bf16.gmra.mxu0 %v1059
    %v1145 = vpop.f32.mrf.mxu0
    %v1146 = vadd.f32 %v999, %v1145
    %v1147 = vpop.f32.mrf.mxu0
    %v1148 = vadd.f32 %v999, %v1147
    %1149 = vdwg.mxu0
    %v1150 = vxor.u32 %v1071, 2147483648
    %v1151 = vxor.u32 %v1073, 2147483648
    %v1152 = vxor.u32 %v1076, 2147483648
    %v1153 = vxor.u32 %v1078, 2147483648
    %v1154 = vxor.u32 %v1081, 2147483648
    %v1155 = vxor.u32 %v1083, 2147483648
    %v1156 = vxor.u32 %v1086, 2147483648
    %v1157 = vxor.u32 %v1088, 2147483648
    %v1158 = vxor.u32 %v1091, 2147483648
    %v1159 = vxor.u32 %v1093, 2147483648
    %v1160 = vxor.u32 %v1096, 2147483648
    %v1161 = vxor.u32 %v1098, 2147483648
    %v1162 = vxor.u32 %v1101, 2147483648
    %v1163 = vxor.u32 %v1103, 2147483648
    %v1164 = vxor.u32 %v1106, 2147483648
    %v1165 = vxor.u32 %v1108, 2147483648
    %v1166 = vxor.u32 %v1111, 2147483648
    %v1167 = vxor.u32 %v1113, 2147483648
    %v1168 = vxor.u32 %v1116, 2147483648
    %v1169 = vxor.u32 %v1118, 2147483648
    %v1170 = vxor.u32 %v1121, 2147483648
    %v1171 = vxor.u32 %v1123, 2147483648
    %v1172 = vxor.u32 %v1126, 2147483648
    %v1173 = vxor.u32 %v1128, 2147483648
    %v1174 = vxor.u32 %v1131, 2147483648
    %v1175 = vxor.u32 %v1133, 2147483648
    %v1176 = vxor.u32 %v1136, 2147483648
    %v1177 = vxor.u32 %v1138, 2147483648
    %v1178 = vxor.u32 %v1141, 2147483648
    %v1179 = vxor.u32 %v1143, 2147483648
    %v1180 = vxor.u32 %v1146, 2147483648
    %v1181 = vxor.u32 %v1148, 2147483648
    %v1182 = vmul.f32 %v1150, 1.442695
    %v1183 = vpow.pop %v1182
    %v1184 = vmul.f32 %v1151, 1.442695
    %v1185 = vpow.pop %v1184
    %v1186 = vmul.f32 %v1152, 1.442695
    %v1187 = vpow.pop %v1186
    %v1188 = vmul.f32 %v1153, 1.442695
    %v1189 = vpow.pop %v1188
    %v1190 = vmul.f32 %v1154, 1.442695
    %v1191 = vpow.pop %v1190
    %v1192 = vmul.f32 %v1155, 1.442695
    %v1193 = vpow.pop %v1192
    %v1194 = vmul.f32 %v1156, 1.442695
    %v1195 = vpow.pop %v1194
    %v1196 = vmul.f32 %v1157, 1.442695
    %v1197 = vpow.pop %v1196
    %v1198 = vmul.f32 %v1158, 1.442695
    %v1199 = vpow.pop %v1198
    %v1200 = vmul.f32 %v1159, 1.442695
    %v1201 = vpow.pop %v1200
    %v1202 = vmul.f32 %v1160, 1.442695
    %v1203 = vpow.pop %v1202
    %v1204 = vmul.f32 %v1161, 1.442695
    %v1205 = vpow.pop %v1204
    %v1206 = vmul.f32 %v1162, 1.442695
    %v1207 = vpow.pop %v1206
    %v1208 = vmul.f32 %v1163, 1.442695
    %v1209 = vpow.pop %v1208
    %v1210 = vmul.f32 %v1164, 1.442695
    %v1211 = vpow.pop %v1210
    %v1212 = vmul.f32 %v1165, 1.442695
    %v1213 = vpow.pop %v1212
    %v1214 = vmul.f32 %v1166, 1.442695
    %v1215 = vpow.pop %v1214
    %v1216 = vmul.f32 %v1167, 1.442695
    %v1217 = vpow.pop %v1216
    %v1218 = vmul.f32 %v1168, 1.442695
    %v1219 = vpow.pop %v1218
    %v1220 = vmul.f32 %v1169, 1.442695
    %v1221 = vpow.pop %v1220
    %v1222 = vmul.f32 %v1170, 1.442695
    %v1223 = vpow.pop %v1222
    %v1224 = vmul.f32 %v1171, 1.442695
    %v1225 = vpow.pop %v1224
    %v1226 = vmul.f32 %v1172, 1.442695
    %v1227 = vpow.pop %v1226
    %v1228 = vmul.f32 %v1173, 1.442695
    %v1229 = vpow.pop %v1228
    %v1230 = vmul.f32 %v1174, 1.442695
    %v1231 = vpow.pop %v1230
    %v1232 = vmul.f32 %v1175, 1.442695
    %v1233 = vpow.pop %v1232
    %v1234 = vmul.f32 %v1176, 1.442695
    %v1235 = vpow.pop %v1234
    %v1236 = vmul.f32 %v1177, 1.442695
    %v1237 = vpow.pop %v1236
    %v1238 = vmul.f32 %v1178, 1.442695
    %v1239 = vpow.pop %v1238
    %v1240 = vmul.f32 %v1179, 1.442695
    %v1241 = vpow.pop %v1240
    %v1242 = vmul.f32 %v1180, 1.442695
    %v1243 = vpow.pop %v1242
    %v1244 = vmul.f32 %v1181, 1.442695
    %v1245 = vpow.pop %v1244
    %v1246 = vadd.f32 %v1183, 1.0
    %v1247 = vadd.f32 %v1185, 1.0
    %v1248 = vadd.f32 %v1187, 1.0
    %v1249 = vadd.f32 %v1189, 1.0
    %v1250 = vadd.f32 %v1191, 1.0
    %v1251 = vadd.f32 %v1193, 1.0
    %v1252 = vadd.f32 %v1195, 1.0
    %v1253 = vadd.f32 %v1197, 1.0
    %v1254 = vadd.f32 %v1199, 1.0
    %v1255 = vadd.f32 %v1201, 1.0
    %v1256 = vadd.f32 %v1203, 1.0
    %v1257 = vadd.f32 %v1205, 1.0
    %v1258 = vadd.f32 %v1207, 1.0
    %v1259 = vadd.f32 %v1209, 1.0
    %v1260 = vadd.f32 %v1211, 1.0
    %v1261 = vadd.f32 %v1213, 1.0
    %v1262 = vadd.f32 %v1215, 1.0
    %v1263 = vadd.f32 %v1217, 1.0
    %v1264 = vadd.f32 %v1219, 1.0
    %v1265 = vadd.f32 %v1221, 1.0
    %v1266 = vadd.f32 %v1223, 1.0
    %v1267 = vadd.f32 %v1225, 1.0
    %v1268 = vadd.f32 %v1227, 1.0
    %v1269 = vadd.f32 %v1229, 1.0
    %v1270 = vadd.f32 %v1231, 1.0
    %v1271 = vadd.f32 %v1233, 1.0
    %v1272 = vadd.f32 %v1235, 1.0
    %v1273 = vadd.f32 %v1237, 1.0
    %v1274 = vadd.f32 %v1239, 1.0
    %v1275 = vadd.f32 %v1241, 1.0
    %v1276 = vadd.f32 %v1243, 1.0
    %v1277 = vadd.f32 %v1245, 1.0
    %v1278 = vrcp.pop %v1246
    %v1279 = vmul.f32 %v1246, %v1278
    %v1280 = vsub.f32 1.0, %v1279
    %v1281 = vmul.f32 %v1278, %v1280
    %v1282 = vadd.f32 %v1278, %v1281
    %vm1283 = vweird.f32 %v1246
    %vm1284 = vweird.f32 %v1278
    %vm1285 = vmor %vm1283, %vm1284
    %v1286 = vsel %vm1285, %v1278, %v1282
    %v1287 = vand.u32 2147483647, %v1246
    %vm1288 = vcmp.eq.f32.partialorder %v1287, 8.507059e+37
    %v1289 = vand.u32 %v1246, 2147483648
    %v1290 = vor.u32 1.1754944e-38, %v1289
    %v1291 = vsel %vm1288, %v1290, %v1286
    %v1292 = vmul.f32 1.0, %v1291
    %v1293 = vrcp.pop %v1247
    %v1294 = vmul.f32 %v1247, %v1293
    %v1295 = vsub.f32 1.0, %v1294
    %v1296 = vmul.f32 %v1293, %v1295
    %v1297 = vadd.f32 %v1293, %v1296
    %vm1298 = vweird.f32 %v1247
    %vm1299 = vweird.f32 %v1293
    %vm1300 = vmor %vm1298, %vm1299
    %v1301 = vsel %vm1300, %v1293, %v1297
    %v1302 = vand.u32 2147483647, %v1247
    %vm1303 = vcmp.eq.f32.partialorder %v1302, 8.507059e+37
    %v1304 = vand.u32 %v1247, 2147483648
    %v1305 = vor.u32 1.1754944e-38, %v1304
    %v1306 = vsel %vm1303, %v1305, %v1301
    %v1307 = vmul.f32 1.0, %v1306
    %v1308 = vrcp.pop %v1248
    %v1309 = vmul.f32 %v1248, %v1308
    %v1310 = vsub.f32 1.0, %v1309
    %v1311 = vmul.f32 %v1308, %v1310
    %v1312 = vadd.f32 %v1308, %v1311
    %vm1313 = vweird.f32 %v1248
    %vm1314 = vweird.f32 %v1308
    %vm1315 = vmor %vm1313, %vm1314
    %v1316 = vsel %vm1315, %v1308, %v1312
    %v1317 = vand.u32 2147483647, %v1248
    %vm1318 = vcmp.eq.f32.partialorder %v1317, 8.507059e+37
    %v1319 = vand.u32 %v1248, 2147483648
    %v1320 = vor.u32 1.1754944e-38, %v1319
    %v1321 = vsel %vm1318, %v1320, %v1316
    %v1322 = vmul.f32 1.0, %v1321
    %v1323 = vrcp.pop %v1249
    %v1324 = vmul.f32 %v1249, %v1323
    %v1325 = vsub.f32 1.0, %v1324
    %v1326 = vmul.f32 %v1323, %v1325
    %v1327 = vadd.f32 %v1323, %v1326
    %vm1328 = vweird.f32 %v1249
    %vm1329 = vweird.f32 %v1323
    %vm1330 = vmor %vm1328, %vm1329
    %v1331 = vsel %vm1330, %v1323, %v1327
    %v1332 = vand.u32 2147483647, %v1249
    %vm1333 = vcmp.eq.f32.partialorder %v1332, 8.507059e+37
    %v1334 = vand.u32 %v1249, 2147483648
    %v1335 = vor.u32 1.1754944e-38, %v1334
    %v1336 = vsel %vm1333, %v1335, %v1331
    %v1337 = vmul.f32 1.0, %v1336
    %v1338 = vrcp.pop %v1250
    %v1339 = vmul.f32 %v1250, %v1338
    %v1340 = vsub.f32 1.0, %v1339
    %v1341 = vmul.f32 %v1338, %v1340
    %v1342 = vadd.f32 %v1338, %v1341
    %vm1343 = vweird.f32 %v1250
    %vm1344 = vweird.f32 %v1338
    %vm1345 = vmor %vm1343, %vm1344
    %v1346 = vsel %vm1345, %v1338, %v1342
    %v1347 = vand.u32 2147483647, %v1250
    %vm1348 = vcmp.eq.f32.partialorder %v1347, 8.507059e+37
    %v1349 = vand.u32 %v1250, 2147483648
    %v1350 = vor.u32 1.1754944e-38, %v1349
    %v1351 = vsel %vm1348, %v1350, %v1346
    %v1352 = vmul.f32 1.0, %v1351
    %v1353 = vrcp.pop %v1251
    %v1354 = vmul.f32 %v1251, %v1353
    %v1355 = vsub.f32 1.0, %v1354
    %v1356 = vmul.f32 %v1353, %v1355
    %v1357 = vadd.f32 %v1353, %v1356
    %vm1358 = vweird.f32 %v1251
    %vm1359 = vweird.f32 %v1353
    %vm1360 = vmor %vm1358, %vm1359
    %v1361 = vsel %vm1360, %v1353, %v1357
    %v1362 = vand.u32 2147483647, %v1251
    %vm1363 = vcmp.eq.f32.partialorder %v1362, 8.507059e+37
    %v1364 = vand.u32 %v1251, 2147483648
    %v1365 = vor.u32 1.1754944e-38, %v1364
    %v1366 = vsel %vm1363, %v1365, %v1361
    %v1367 = vmul.f32 1.0, %v1366
    %v1368 = vrcp.pop %v1252
    %v1369 = vmul.f32 %v1252, %v1368
    %v1370 = vsub.f32 1.0, %v1369
    %v1371 = vmul.f32 %v1368, %v1370
    %v1372 = vadd.f32 %v1368, %v1371
    %vm1373 = vweird.f32 %v1252
    %vm1374 = vweird.f32 %v1368
    %vm1375 = vmor %vm1373, %vm1374
    %v1376 = vsel %vm1375, %v1368, %v1372
    %v1377 = vand.u32 2147483647, %v1252
    %vm1378 = vcmp.eq.f32.partialorder %v1377, 8.507059e+37
    %v1379 = vand.u32 %v1252, 2147483648
    %v1380 = vor.u32 1.1754944e-38, %v1379
    %v1381 = vsel %vm1378, %v1380, %v1376
    %v1382 = vmul.f32 1.0, %v1381
    %v1383 = vrcp.pop %v1253
    %v1384 = vmul.f32 %v1253, %v1383
    %v1385 = vsub.f32 1.0, %v1384
    %v1386 = vmul.f32 %v1383, %v1385
    %v1387 = vadd.f32 %v1383, %v1386
    %vm1388 = vweird.f32 %v1253
    %vm1389 = vweird.f32 %v1383
    %vm1390 = vmor %vm1388, %vm1389
    %v1391 = vsel %vm1390, %v1383, %v1387
    %v1392 = vand.u32 2147483647, %v1253
    %vm1393 = vcmp.eq.f32.partialorder %v1392, 8.507059e+37
    %v1394 = vand.u32 %v1253, 2147483648
    %v1395 = vor.u32 1.1754944e-38, %v1394
    %v1396 = vsel %vm1393, %v1395, %v1391
    %v1397 = vmul.f32 1.0, %v1396
    %v1398 = vrcp.pop %v1254
    %v1399 = vmul.f32 %v1254, %v1398
    %v1400 = vsub.f32 1.0, %v1399
    %v1401 = vmul.f32 %v1398, %v1400
    %v1402 = vadd.f32 %v1398, %v1401
    %vm1403 = vweird.f32 %v1254
    %vm1404 = vweird.f32 %v1398
    %vm1405 = vmor %vm1403, %vm1404
    %v1406 = vsel %vm1405, %v1398, %v1402
    %v1407 = vand.u32 2147483647, %v1254
    %vm1408 = vcmp.eq.f32.partialorder %v1407, 8.507059e+37
    %v1409 = vand.u32 %v1254, 2147483648
    %v1410 = vor.u32 1.1754944e-38, %v1409
    %v1411 = vsel %vm1408, %v1410, %v1406
    %v1412 = vmul.f32 1.0, %v1411
    %v1413 = vrcp.pop %v1255
    %v1414 = vmul.f32 %v1255, %v1413
    %v1415 = vsub.f32 1.0, %v1414
    %v1416 = vmul.f32 %v1413, %v1415
    %v1417 = vadd.f32 %v1413, %v1416
    %vm1418 = vweird.f32 %v1255
    %vm1419 = vweird.f32 %v1413
    %vm1420 = vmor %vm1418, %vm1419
    %v1421 = vsel %vm1420, %v1413, %v1417
    %v1422 = vand.u32 2147483647, %v1255
    %vm1423 = vcmp.eq.f32.partialorder %v1422, 8.507059e+37
    %v1424 = vand.u32 %v1255, 2147483648
    %v1425 = vor.u32 1.1754944e-38, %v1424
    %v1426 = vsel %vm1423, %v1425, %v1421
    %v1427 = vmul.f32 1.0, %v1426
    %v1428 = vrcp.pop %v1256
    %v1429 = vmul.f32 %v1256, %v1428
    %v1430 = vsub.f32 1.0, %v1429
    %v1431 = vmul.f32 %v1428, %v1430
    %v1432 = vadd.f32 %v1428, %v1431
    %vm1433 = vweird.f32 %v1256
    %vm1434 = vweird.f32 %v1428
    %vm1435 = vmor %vm1433, %vm1434
    %v1436 = vsel %vm1435, %v1428, %v1432
    %v1437 = vand.u32 2147483647, %v1256
    %vm1438 = vcmp.eq.f32.partialorder %v1437, 8.507059e+37
    %v1439 = vand.u32 %v1256, 2147483648
    %v1440 = vor.u32 1.1754944e-38, %v1439
    %v1441 = vsel %vm1438, %v1440, %v1436
    %v1442 = vmul.f32 1.0, %v1441
    %v1443 = vrcp.pop %v1257
    %v1444 = vmul.f32 %v1257, %v1443
    %v1445 = vsub.f32 1.0, %v1444
    %v1446 = vmul.f32 %v1443, %v1445
    %v1447 = vadd.f32 %v1443, %v1446
    %vm1448 = vweird.f32 %v1257
    %vm1449 = vweird.f32 %v1443
    %vm1450 = vmor %vm1448, %vm1449
    %v1451 = vsel %vm1450, %v1443, %v1447
    %v1452 = vand.u32 2147483647, %v1257
    %vm1453 = vcmp.eq.f32.partialorder %v1452, 8.507059e+37
    %v1454 = vand.u32 %v1257, 2147483648
    %v1455 = vor.u32 1.1754944e-38, %v1454
    %v1456 = vsel %vm1453, %v1455, %v1451
    %v1457 = vmul.f32 1.0, %v1456
    %v1458 = vrcp.pop %v1258
    %v1459 = vmul.f32 %v1258, %v1458
    %v1460 = vsub.f32 1.0, %v1459
    %v1461 = vmul.f32 %v1458, %v1460
    %v1462 = vadd.f32 %v1458, %v1461
    %vm1463 = vweird.f32 %v1258
    %vm1464 = vweird.f32 %v1458
    %vm1465 = vmor %vm1463, %vm1464
    %v1466 = vsel %vm1465, %v1458, %v1462
    %v1467 = vand.u32 2147483647, %v1258
    %vm1468 = vcmp.eq.f32.partialorder %v1467, 8.507059e+37
    %v1469 = vand.u32 %v1258, 2147483648
    %v1470 = vor.u32 1.1754944e-38, %v1469
    %v1471 = vsel %vm1468, %v1470, %v1466
    %v1472 = vmul.f32 1.0, %v1471
    %v1473 = vrcp.pop %v1259
    %v1474 = vmul.f32 %v1259, %v1473
    %v1475 = vsub.f32 1.0, %v1474
    %v1476 = vmul.f32 %v1473, %v1475
    %v1477 = vadd.f32 %v1473, %v1476
    %vm1478 = vweird.f32 %v1259
    %vm1479 = vweird.f32 %v1473
    %vm1480 = vmor %vm1478, %vm1479
    %v1481 = vsel %vm1480, %v1473, %v1477
    %v1482 = vand.u32 2147483647, %v1259
    %vm1483 = vcmp.eq.f32.partialorder %v1482, 8.507059e+37
    %v1484 = vand.u32 %v1259, 2147483648
    %v1485 = vor.u32 1.1754944e-38, %v1484
    %v1486 = vsel %vm1483, %v1485, %v1481
    %v1487 = vmul.f32 1.0, %v1486
    %v1488 = vrcp.pop %v1260
    %v1489 = vmul.f32 %v1260, %v1488
    %v1490 = vsub.f32 1.0, %v1489
    %v1491 = vmul.f32 %v1488, %v1490
    %v1492 = vadd.f32 %v1488, %v1491
    %vm1493 = vweird.f32 %v1260
    %vm1494 = vweird.f32 %v1488
    %vm1495 = vmor %vm1493, %vm1494
    %v1496 = vsel %vm1495, %v1488, %v1492
    %v1497 = vand.u32 2147483647, %v1260
    %vm1498 = vcmp.eq.f32.partialorder %v1497, 8.507059e+37
    %v1499 = vand.u32 %v1260, 2147483648
    %v1500 = vor.u32 1.1754944e-38, %v1499
    %v1501 = vsel %vm1498, %v1500, %v1496
    %v1502 = vmul.f32 1.0, %v1501
    %v1503 = vrcp.pop %v1261
    %v1504 = vmul.f32 %v1261, %v1503
    %v1505 = vsub.f32 1.0, %v1504
    %v1506 = vmul.f32 %v1503, %v1505
    %v1507 = vadd.f32 %v1503, %v1506
    %vm1508 = vweird.f32 %v1261
    %vm1509 = vweird.f32 %v1503
    %vm1510 = vmor %vm1508, %vm1509
    %v1511 = vsel %vm1510, %v1503, %v1507
    %v1512 = vand.u32 2147483647, %v1261
    %vm1513 = vcmp.eq.f32.partialorder %v1512, 8.507059e+37
    %v1514 = vand.u32 %v1261, 2147483648
    %v1515 = vor.u32 1.1754944e-38, %v1514
    %v1516 = vsel %vm1513, %v1515, %v1511
    %v1517 = vmul.f32 1.0, %v1516
    %v1518 = vrcp.pop %v1262
    %v1519 = vmul.f32 %v1262, %v1518
    %v1520 = vsub.f32 1.0, %v1519
    %v1521 = vmul.f32 %v1518, %v1520
    %v1522 = vadd.f32 %v1518, %v1521
    %vm1523 = vweird.f32 %v1262
    %vm1524 = vweird.f32 %v1518
    %vm1525 = vmor %vm1523, %vm1524
    %v1526 = vsel %vm1525, %v1518, %v1522
    %v1527 = vand.u32 2147483647, %v1262
    %vm1528 = vcmp.eq.f32.partialorder %v1527, 8.507059e+37
    %v1529 = vand.u32 %v1262, 2147483648
    %v1530 = vor.u32 1.1754944e-38, %v1529
    %v1531 = vsel %vm1528, %v1530, %v1526
    %v1532 = vmul.f32 1.0, %v1531
    %v1533 = vrcp.pop %v1263
    %v1534 = vmul.f32 %v1263, %v1533
    %v1535 = vsub.f32 1.0, %v1534
    %v1536 = vmul.f32 %v1533, %v1535
    %v1537 = vadd.f32 %v1533, %v1536
    %vm1538 = vweird.f32 %v1263
    %vm1539 = vweird.f32 %v1533
    %vm1540 = vmor %vm1538, %vm1539
    %v1541 = vsel %vm1540, %v1533, %v1537
    %v1542 = vand.u32 2147483647, %v1263
    %vm1543 = vcmp.eq.f32.partialorder %v1542, 8.507059e+37
    %v1544 = vand.u32 %v1263, 2147483648
    %v1545 = vor.u32 1.1754944e-38, %v1544
    %v1546 = vsel %vm1543, %v1545, %v1541
    %v1547 = vmul.f32 1.0, %v1546
    %v1548 = vrcp.pop %v1264
    %v1549 = vmul.f32 %v1264, %v1548
    %v1550 = vsub.f32 1.0, %v1549
    %v1551 = vmul.f32 %v1548, %v1550
    %v1552 = vadd.f32 %v1548, %v1551
    %vm1553 = vweird.f32 %v1264
    %vm1554 = vweird.f32 %v1548
    %vm1555 = vmor %vm1553, %vm1554
    %v1556 = vsel %vm1555, %v1548, %v1552
    %v1557 = vand.u32 2147483647, %v1264
    %vm1558 = vcmp.eq.f32.partialorder %v1557, 8.507059e+37
    %v1559 = vand.u32 %v1264, 2147483648
    %v1560 = vor.u32 1.1754944e-38, %v1559
    %v1561 = vsel %vm1558, %v1560, %v1556
    %v1562 = vmul.f32 1.0, %v1561
    %v1563 = vrcp.pop %v1265
    %v1564 = vmul.f32 %v1265, %v1563
    %v1565 = vsub.f32 1.0, %v1564
    %v1566 = vmul.f32 %v1563, %v1565
    %v1567 = vadd.f32 %v1563, %v1566
    %vm1568 = vweird.f32 %v1265
    %vm1569 = vweird.f32 %v1563
    %vm1570 = vmor %vm1568, %vm1569
    %v1571 = vsel %vm1570, %v1563, %v1567
    %v1572 = vand.u32 2147483647, %v1265
    %vm1573 = vcmp.eq.f32.partialorder %v1572, 8.507059e+37
    %v1574 = vand.u32 %v1265, 2147483648
    %v1575 = vor.u32 1.1754944e-38, %v1574
    %v1576 = vsel %vm1573, %v1575, %v1571
    %v1577 = vmul.f32 1.0, %v1576
    %v1578 = vrcp.pop %v1266
    %v1579 = vmul.f32 %v1266, %v1578
    %v1580 = vsub.f32 1.0, %v1579
    %v1581 = vmul.f32 %v1578, %v1580
    %v1582 = vadd.f32 %v1578, %v1581
    %vm1583 = vweird.f32 %v1266
    %vm1584 = vweird.f32 %v1578
    %vm1585 = vmor %vm1583, %vm1584
    %v1586 = vsel %vm1585, %v1578, %v1582
    %v1587 = vand.u32 2147483647, %v1266
    %vm1588 = vcmp.eq.f32.partialorder %v1587, 8.507059e+37
    %v1589 = vand.u32 %v1266, 2147483648
    %v1590 = vor.u32 1.1754944e-38, %v1589
    %v1591 = vsel %vm1588, %v1590, %v1586
    %v1592 = vmul.f32 1.0, %v1591
    %v1593 = vrcp.pop %v1267
    %v1594 = vmul.f32 %v1267, %v1593
    %v1595 = vsub.f32 1.0, %v1594
    %v1596 = vmul.f32 %v1593, %v1595
    %v1597 = vadd.f32 %v1593, %v1596
    %vm1598 = vweird.f32 %v1267
    %vm1599 = vweird.f32 %v1593
    %vm1600 = vmor %vm1598, %vm1599
    %v1601 = vsel %vm1600, %v1593, %v1597
    %v1602 = vand.u32 2147483647, %v1267
    %vm1603 = vcmp.eq.f32.partialorder %v1602, 8.507059e+37
    %v1604 = vand.u32 %v1267, 2147483648
    %v1605 = vor.u32 1.1754944e-38, %v1604
    %v1606 = vsel %vm1603, %v1605, %v1601
    %v1607 = vmul.f32 1.0, %v1606
    %v1608 = vrcp.pop %v1268
    %v1609 = vmul.f32 %v1268, %v1608
    %v1610 = vsub.f32 1.0, %v1609
    %v1611 = vmul.f32 %v1608, %v1610
    %v1612 = vadd.f32 %v1608, %v1611
    %vm1613 = vweird.f32 %v1268
    %vm1614 = vweird.f32 %v1608
    %vm1615 = vmor %vm1613, %vm1614
    %v1616 = vsel %vm1615, %v1608, %v1612
    %v1617 = vand.u32 2147483647, %v1268
    %vm1618 = vcmp.eq.f32.partialorder %v1617, 8.507059e+37
    %v1619 = vand.u32 %v1268, 2147483648
    %v1620 = vor.u32 1.1754944e-38, %v1619
    %v1621 = vsel %vm1618, %v1620, %v1616
    %v1622 = vmul.f32 1.0, %v1621
    %v1623 = vrcp.pop %v1269
    %v1624 = vmul.f32 %v1269, %v1623
    %v1625 = vsub.f32 1.0, %v1624
    %v1626 = vmul.f32 %v1623, %v1625
    %v1627 = vadd.f32 %v1623, %v1626
    %vm1628 = vweird.f32 %v1269
    %vm1629 = vweird.f32 %v1623
    %vm1630 = vmor %vm1628, %vm1629
    %v1631 = vsel %vm1630, %v1623, %v1627
    %v1632 = vand.u32 2147483647, %v1269
    %vm1633 = vcmp.eq.f32.partialorder %v1632, 8.507059e+37
    %v1634 = vand.u32 %v1269, 2147483648
    %v1635 = vor.u32 1.1754944e-38, %v1634
    %v1636 = vsel %vm1633, %v1635, %v1631
    %v1637 = vmul.f32 1.0, %v1636
    %v1638 = vrcp.pop %v1270
    %v1639 = vmul.f32 %v1270, %v1638
    %v1640 = vsub.f32 1.0, %v1639
    %v1641 = vmul.f32 %v1638, %v1640
    %v1642 = vadd.f32 %v1638, %v1641
    %vm1643 = vweird.f32 %v1270
    %vm1644 = vweird.f32 %v1638
    %vm1645 = vmor %vm1643, %vm1644
    %v1646 = vsel %vm1645, %v1638, %v1642
    %v1647 = vand.u32 2147483647, %v1270
    %vm1648 = vcmp.eq.f32.partialorder %v1647, 8.507059e+37
    %v1649 = vand.u32 %v1270, 2147483648
    %v1650 = vor.u32 1.1754944e-38, %v1649
    %v1651 = vsel %vm1648, %v1650, %v1646
    %v1652 = vmul.f32 1.0, %v1651
    %v1653 = vrcp.pop %v1271
    %v1654 = vmul.f32 %v1271, %v1653
    %v1655 = vsub.f32 1.0, %v1654
    %v1656 = vmul.f32 %v1653, %v1655
    %v1657 = vadd.f32 %v1653, %v1656
    %vm1658 = vweird.f32 %v1271
    %vm1659 = vweird.f32 %v1653
    %vm1660 = vmor %vm1658, %vm1659
    %v1661 = vsel %vm1660, %v1653, %v1657
    %v1662 = vand.u32 2147483647, %v1271
    %vm1663 = vcmp.eq.f32.partialorder %v1662, 8.507059e+37
    %v1664 = vand.u32 %v1271, 2147483648
    %v1665 = vor.u32 1.1754944e-38, %v1664
    %v1666 = vsel %vm1663, %v1665, %v1661
    %v1667 = vmul.f32 1.0, %v1666
    %v1668 = vrcp.pop %v1272
    %v1669 = vmul.f32 %v1272, %v1668
    %v1670 = vsub.f32 1.0, %v1669
    %v1671 = vmul.f32 %v1668, %v1670
    %v1672 = vadd.f32 %v1668, %v1671
    %vm1673 = vweird.f32 %v1272
    %vm1674 = vweird.f32 %v1668
    %vm1675 = vmor %vm1673, %vm1674
    %v1676 = vsel %vm1675, %v1668, %v1672
    %v1677 = vand.u32 2147483647, %v1272
    %vm1678 = vcmp.eq.f32.partialorder %v1677, 8.507059e+37
    %v1679 = vand.u32 %v1272, 2147483648
    %v1680 = vor.u32 1.1754944e-38, %v1679
    %v1681 = vsel %vm1678, %v1680, %v1676
    %v1682 = vmul.f32 1.0, %v1681
    %v1683 = vrcp.pop %v1273
    %v1684 = vmul.f32 %v1273, %v1683
    %v1685 = vsub.f32 1.0, %v1684
    %v1686 = vmul.f32 %v1683, %v1685
    %v1687 = vadd.f32 %v1683, %v1686
    %vm1688 = vweird.f32 %v1273
    %vm1689 = vweird.f32 %v1683
    %vm1690 = vmor %vm1688, %vm1689
    %v1691 = vsel %vm1690, %v1683, %v1687
    %v1692 = vand.u32 2147483647, %v1273
    %vm1693 = vcmp.eq.f32.partialorder %v1692, 8.507059e+37
    %v1694 = vand.u32 %v1273, 2147483648
    %v1695 = vor.u32 1.1754944e-38, %v1694
    %v1696 = vsel %vm1693, %v1695, %v1691
    %v1697 = vmul.f32 1.0, %v1696
    %v1698 = vrcp.pop %v1274
    %v1699 = vmul.f32 %v1274, %v1698
    %v1700 = vsub.f32 1.0, %v1699
    %v1701 = vmul.f32 %v1698, %v1700
    %v1702 = vadd.f32 %v1698, %v1701
    %vm1703 = vweird.f32 %v1274
    %vm1704 = vweird.f32 %v1698
    %vm1705 = vmor %vm1703, %vm1704
    %v1706 = vsel %vm1705, %v1698, %v1702
    %v1707 = vand.u32 2147483647, %v1274
    %vm1708 = vcmp.eq.f32.partialorder %v1707, 8.507059e+37
    %v1709 = vand.u32 %v1274, 2147483648
    %v1710 = vor.u32 1.1754944e-38, %v1709
    %v1711 = vsel %vm1708, %v1710, %v1706
    %v1712 = vmul.f32 1.0, %v1711
    %v1713 = vrcp.pop %v1275
    %v1714 = vmul.f32 %v1275, %v1713
    %v1715 = vsub.f32 1.0, %v1714
    %v1716 = vmul.f32 %v1713, %v1715
    %v1717 = vadd.f32 %v1713, %v1716
    %vm1718 = vweird.f32 %v1275
    %vm1719 = vweird.f32 %v1713
    %vm1720 = vmor %vm1718, %vm1719
    %v1721 = vsel %vm1720, %v1713, %v1717
    %v1722 = vand.u32 2147483647, %v1275
    %vm1723 = vcmp.eq.f32.partialorder %v1722, 8.507059e+37
    %v1724 = vand.u32 %v1275, 2147483648
    %v1725 = vor.u32 1.1754944e-38, %v1724
    %v1726 = vsel %vm1723, %v1725, %v1721
    %v1727 = vmul.f32 1.0, %v1726
    %v1728 = vrcp.pop %v1276
    %v1729 = vmul.f32 %v1276, %v1728
    %v1730 = vsub.f32 1.0, %v1729
    %v1731 = vmul.f32 %v1728, %v1730
    %v1732 = vadd.f32 %v1728, %v1731
    %vm1733 = vweird.f32 %v1276
    %vm1734 = vweird.f32 %v1728
    %vm1735 = vmor %vm1733, %vm1734
    %v1736 = vsel %vm1735, %v1728, %v1732
    %v1737 = vand.u32 2147483647, %v1276
    %vm1738 = vcmp.eq.f32.partialorder %v1737, 8.507059e+37
    %v1739 = vand.u32 %v1276, 2147483648
    %v1740 = vor.u32 1.1754944e-38, %v1739
    %v1741 = vsel %vm1738, %v1740, %v1736
    %v1742 = vmul.f32 1.0, %v1741
    %v1743 = vrcp.pop %v1277
    %v1744 = vmul.f32 %v1277, %v1743
    %v1745 = vsub.f32 1.0, %v1744
    %v1746 = vmul.f32 %v1743, %v1745
    %v1747 = vadd.f32 %v1743, %v1746
    %vm1748 = vweird.f32 %v1277
    %vm1749 = vweird.f32 %v1743
    %vm1750 = vmor %vm1748, %vm1749
    %v1751 = vsel %vm1750, %v1743, %v1747
    %v1752 = vand.u32 2147483647, %v1277
    %vm1753 = vcmp.eq.f32.partialorder %v1752, 8.507059e+37
    %v1754 = vand.u32 %v1277, 2147483648
    %v1755 = vor.u32 1.1754944e-38, %v1754
    %v1756 = vsel %vm1753, %v1755, %v1751
    %v1757 = vmul.f32 1.0, %v1756
    %1758 = vst [vmem:[#allocation4] sm:$0xff] %v1292
    %1759 = vst [vmem:[#allocation4 + $0x8] sm:$0xff] %v1307
    %1760 = vst [vmem:[#allocation4 + $0x10] sm:$0xff] %v1322
    %1761 = vst [vmem:[#allocation4 + $0x18] sm:$0xff] %v1337
    %1762 = vst [vmem:[#allocation4 + $0x20] sm:$0xff] %v1352
    %1763 = vst [vmem:[#allocation4 + $0x28] sm:$0xff] %v1367
    %1764 = vst [vmem:[#allocation4 + $0x30] sm:$0xff] %v1382
    %1765 = vst [vmem:[#allocation4 + $0x38] sm:$0xff] %v1397
    %1766 = vst [vmem:[#allocation4 + $0x40] sm:$0xff] %v1412
    %1767 = vst [vmem:[#allocation4 + $0x48] sm:$0xff] %v1427
    %1768 = vst [vmem:[#allocation4 + $0x50] sm:$0xff] %v1442
    %1769 = vst [vmem:[#allocation4 + $0x58] sm:$0xff] %v1457
    %1770 = vst [vmem:[#allocation4 + $0x60] sm:$0xff] %v1472
    %1771 = vst [vmem:[#allocation4 + $0x68] sm:$0xff] %v1487
    %1772 = vst [vmem:[#allocation4 + $0x70] sm:$0xff] %v1502
    %1773 = vst [vmem:[#allocation4 + $0x78] sm:$0xff] %v1517
    %1774 = vst [vmem:[#allocation4 + $0x80] sm:$0xff] %v1532
    %1775 = vst [vmem:[#allocation4 + $0x88] sm:$0xff] %v1547
    %1776 = vst [vmem:[#allocation4 + $0x90] sm:$0xff] %v1562
    %1777 = vst [vmem:[#allocation4 + $0x98] sm:$0xff] %v1577
    %1778 = vst [vmem:[#allocation4 + $0xa0] sm:$0xff] %v1592
    %1779 = vst [vmem:[#allocation4 + $0xa8] sm:$0xff] %v1607
    %1780 = vst [vmem:[#allocation4 + $0xb0] sm:$0xff] %v1622
    %1781 = vst [vmem:[#allocation4 + $0xb8] sm:$0xff] %v1637
    %1782 = vst [vmem:[#allocation4 + $0xc0] sm:$0xff] %v1652
    %1783 = vst [vmem:[#allocation4 + $0xc8] sm:$0xff] %v1667
    %1784 = vst [vmem:[#allocation4 + $0xd0] sm:$0xff] %v1682
    %1785 = vst [vmem:[#allocation4 + $0xd8] sm:$0xff] %v1697
    %1786 = vst [vmem:[#allocation4 + $0xe0] sm:$0xff] %v1712
    %1787 = vst [vmem:[#allocation4 + $0xe8] sm:$0xff] %v1727
    %1788 = vst [vmem:[#allocation4 + $0xf0] sm:$0xff] %v1742
    %1789 = vst [vmem:[#allocation4 + $0xf8] sm:$0xff] %v1757
    // Predicated region
    $region38: #{tpu_custom_call.1} parent=1 // pred_check
      _
    $region39: #{tpu_custom_call.1} parent=1 // pred_check_branch
      %1791 = sbr.rel (0) target = $region41
    $region40: #{tpu_custom_call.1} parent=1 // pred_region
      %1793 = vsyncadd [#allocation5], 0
      %s1794 = sshll.u32 [#allocation4], 4
      %s1795 = int_to_ptr.vmem [resolvable:$true] %s1794
      %s1796 = sshll.u32 %s10, 4
      %s1797 = int_to_ptr.hbm [resolvable:$true] %s1796
      %1802 = dma.vmem_to_hbm [thread:$0]  %s1795, 4096, %s1797, [#allocation5], 128, 128, 8
    $region41: #{tpu_custom_call.1} parent=1 // pred_fallthru
      _
    // Predicated region
    $region42: #{tpu_custom_call.1} parent=1 // pred_check
      _
    $region43: #{tpu_custom_call.1} parent=1 // pred_check_branch
      %1804 = sbr.rel (0) target = $region45
    $region44: #{tpu_custom_call.1} parent=1 // pred_region
      %1806 = dma.done [#allocation5], 4096
    $region45: #{tpu_custom_call.1} parent=1 // pred_fallthru
      _
    %1807 = vsyncpa [#allocation5], 1

</llo_original>
